<compile_context>
chip_gen: v7x
topology: tpu7x:2x2x1
jax: 0.10.0
libtpu: 0.0.40
codegen_flags: <defaults>
</compile_context>

<pallas_src>
import math
import functools

import jax
import jax.numpy as jnp
from jax.experimental import pallas as pl
from jax.experimental.pallas import tpu as pltpu


def _bert_self_attention_kernel(hfull_ref, hq_ref, mask_ref, wq_ref, bq_ref,
                                wkv_ref, bkv_ref,
                                ctx_ref, probs_ref,
                                k_scr, v_scr,
                                *, num_heads, head_size,
                                softmax_dtype, approx_reciprocal):
    """Grid = (batch, query-tiles).

    hfull_ref: (1, S, H)       full sequence (re-used across q tiles, K/V proj)
    hq_ref:    (1, bq, H)      current query tile of the sequence
    mask_ref:  (1, 1, 1, S)    additive attention mask
    wq_ref:    (H, H)          Q weight with 1/sqrt(d) pre-folded
    bq_ref:    (1, H)          Q bias with 1/sqrt(d) pre-folded (f32)
    wkv_ref:   (H, 2H)         fused [Wk | Wv]
    bkv_ref:   (1, 2H)         fused [bk | bv] (f32)
    ctx_ref:   (1, bq, H)      context tile (single lane-dense store)
    probs_ref: (1, heads, bq, S)
    k/v_scr:   (heads, S, d)   scratch in matmul dtype, filled once per batch
    """
    qt = pl.program_id(1)
    S = hfull_ref.shape[1]
    block_q = hq_ref.shape[1]
    H = num_heads * head_size

    # ---- once per batch element: fused K/V projection into head-major scratch
    @pl.when(qt == 0)
    def _():
        x = hfull_ref[0]                                          # (S, H)
        kv = jnp.dot(x, wkv_ref[...],
                     preferred_element_type=jnp.float32)
        kv = kv + bkv_ref[0]                                      # (S, 2H) f32

        def to_heads(m):                      # (S, H) -> (heads, S, d)
            return m.reshape(S, num_heads, head_size).transpose(1, 0, 2)

        k_scr[...] = to_heads(kv[:, :H]).astype(k_scr.dtype)
        v_scr[...] = to_heads(kv[:, H:]).astype(v_scr.dtype)

    # ---- per query tile: project only this tile's Q (no qt==0 bubble).
    xq = hq_ref[0]                                                # (bq, H)
    q = jnp.dot(xq, wq_ref[...], preferred_element_type=jnp.float32)
    q = q + bq_ref[0]                         # scale already folded into wq/bq
    qh = (q.reshape(block_q, num_heads, head_size)
            .transpose(1, 0, 2).astype(k_scr.dtype))              # (heads, bq, d)

    # Head-batched QK^T: contracts the last dims of both operands (reference
    # flash-attention pattern), so no K transpose is materialized in-kernel.
    scores = jnp.einsum("hqd,hkd->hqk", qh, k_scr[...],
                        preferred_element_type=jnp.float32)       # (heads, bq, S)
    scores = scores + mask_ref[0, 0]          # (1, S) additive mask, one broadcast

    # Numerically-stable softmax over keys: reductions stay f32, the
    # elementwise exp/mul stream runs in `softmax_dtype` (bf16 on v6e/v7x).
    m = jnp.max(scores, axis=-1, keepdims=True)
    e = jnp.exp((scores - m).astype(softmax_dtype))
    denom = jnp.sum(e.astype(jnp.float32), axis=-1, keepdims=True)
    inv = pl.reciprocal(denom, approx=approx_reciprocal)
    probs = e * inv.astype(softmax_dtype)
    # TODO(synk): training-mode dropout on attention_probs not implemented
    #             (inference / p=0.0); would use pltpu.prng_seed + prng_random_bits.

    probs_ref[0] = probs.astype(probs_ref.dtype)

    ctx_h = jnp.einsum("hqk,hkd->hqd", probs.astype(v_scr.dtype), v_scr[...],
                       preferred_element_type=jnp.float32)        # (heads, bq, d)
    # Merge heads and store lane-dense in a single (block_q, H) write.
    ctx_ref[0] = (ctx_h.transpose(1, 0, 2)
                       .reshape(block_q, H).astype(ctx_ref.dtype))


def bert_self_attention(hidden_states, attention_mask,
                        wq, bq, wk, bk, wv, bv, *,
                        num_heads, block_q=None,
                        matmul_dtype=jnp.bfloat16,
                        probs_dtype=jnp.float32,
                        softmax_dtype=jnp.float32,
                        approx_reciprocal=True,
                        vmem_limit_bytes=48 * 1024 * 1024):
    """hidden_states: (B, S, H); attention_mask: (B, 1, 1, S) additive mask.
    Weights are (H_in, H_out) == PyTorch nn.Linear weight transposed.
    Returns (context_layer (B, S, H), attention_probs (B, heads, S, S)).

    Knobs (defaults chosen per the perf review):
      matmul_dtype      bf16 MXU inputs + bf16 K/V scratch (f32 accumulation).
      probs_dtype       set jnp.bfloat16 to halve the dominant probs writeback.
      softmax_dtype     set jnp.bfloat16 on v6e/v7x (keep f32 on v5e).
      approx_reciprocal EUP vrcp for the softmax denominator.
    """
    B, S, H = hidden_states.shape
    assert H % num_heads == 0
    head_size = H // num_heads

    # Fold the 1/sqrt(d) softmax scale into the Q projection (free, host-side)
    # and fuse the K/V projections into one (H, 2H) weight / (1, 2H) bias.
    scale = 1.0 / math.sqrt(head_size)
    wq_s = (wq * scale).astype(matmul_dtype)
    bq_s = (bq * scale).reshape(1, H).astype(jnp.float32)
    wkv = jnp.concatenate([wk, wv], axis=1).astype(matmul_dtype)
    bkv = jnp.concatenate([bk, bv]).reshape(1, 2 * H).astype(jnp.float32)
    x = hidden_states.astype(matmul_dtype)
    mask = attention_mask.astype(jnp.float32)

    # Query tiling: smallest workable tile (never 512) keeps the per-step
    # scores/probs temporaries small (v7x 64 MiB VMEM) and gives the probs
    # writeback DMA something to overlap with.
    if block_q is None:
        block_q = S
        for cand in (128, 256):
            if S % cand == 0:
                block_q = cand
                break
    assert S % block_q == 0
    num_q_tiles = S // block_q

    kernel = functools.partial(_bert_self_attention_kernel,
                               num_heads=num_heads, head_size=head_size,
                               softmax_dtype=softmax_dtype,
                               approx_reciprocal=approx_reciprocal)

    grid_spec = pltpu.PrefetchScalarGridSpec(
        num_scalar_prefetch=0,
        grid=(B, num_q_tiles),
        in_specs=[
            # Full sequence per batch element (constant across q tiles, so it
            # is DMA'd once per batch element) — used for the K/V projection.
            pl.BlockSpec((1, S, H), lambda b, qt: (b, 0, 0)),
            # Current query tile of the same tensor — pipelined per grid step.
            pl.BlockSpec((1, block_q, H), lambda b, qt: (b, qt, 0)),
            pl.BlockSpec((1, 1, 1, S), lambda b, qt: (b, 0, 0, 0)),
            pl.BlockSpec((H, H), lambda b, qt: (0, 0)),
            pl.BlockSpec((1, H), lambda b, qt: (0, 0)),
            pl.BlockSpec((H, 2 * H), lambda b, qt: (0, 0)),
            pl.BlockSpec((1, 2 * H), lambda b, qt: (0, 0)),
        ],
        out_specs=(
            pl.BlockSpec((1, block_q, H), lambda b, qt: (b, qt, 0)),
            pl.BlockSpec((1, num_heads, block_q, S), lambda b, qt: (b, 0, qt, 0)),
        ),
        scratch_shapes=[
            pltpu.VMEM((num_heads, S, head_size), matmul_dtype),   # K
            pltpu.VMEM((num_heads, S, head_size), matmul_dtype),   # V
        ],
    )

    return pl.pallas_call(
        kernel,
        out_shape=(
            jax.ShapeDtypeStruct((B, S, H), jnp.float32),
            jax.ShapeDtypeStruct((B, num_heads, S, S), probs_dtype),
        ),
        grid_spec=grid_spec,
        compiler_params=pltpu.CompilerParams(
            # Batch is independent (megacore-shardable); the q-tile axis carries
            # K/V scratch across iterations, so it must stay "arbitrary".
            dimension_semantics=("parallel", "arbitrary"),
            vmem_limit_bytes=vmem_limit_bytes,
        ),
    )(x, x, mask, wq_s, bq_s, wkv, bkv)


def _reference(hidden_states, attention_mask, wq, bq, wk, bk, wv, bv, num_heads):
    B, S, H = hidden_states.shape
    d = H // num_heads
    q = hidden_states @ wq + bq
    k = hidden_states @ wk + bk
    v = hidden_states @ wv + bv

    def split(t):  # (B,S,H) -> (B,heads,S,d)
        return t.reshape(B, S, num_heads, d).transpose(0, 2, 1, 3)

    q, k, v = split(q), split(k), split(v)
    scores = jnp.einsum("bhqd,bhkd->bhqk", q, k) / math.sqrt(d)
    scores = scores + attention_mask                      # broadcast (B,1,1,S)
    probs = jax.nn.softmax(scores, axis=-1)
    ctx = jnp.einsum("bhqk,bhkd->bhqd", probs, v)
    ctx = ctx.transpose(0, 2, 1, 3).reshape(B, S, H)
    return ctx, probs


if __name__ == "__main__":
    B, S, H, num_heads = 2, 8, 32, 4

    key = jax.random.PRNGKey(0)
    ks = jax.random.split(key, 9)
    hidden_states = jax.random.normal(ks[0], (B, S, H), dtype=jnp.float32)
    # Standard BERT additive mask: 0 for attended positions, -10000 for masked.
    pad = (jax.random.uniform(ks[1], (B, 1, 1, S)) > 0.8).astype(jnp.float32)
    attention_mask = pad * -10000.0

    init = lambda k, shape: 0.02 * jax.random.normal(k, shape, dtype=jnp.float32)
    wq, wk, wv = init(ks[2], (H, H)), init(ks[3], (H, H)), init(ks[4], (H, H))
    bq, bk, bv = init(ks[5], (H,)), init(ks[6], (H,)), init(ks[7], (H,))

    ref_ctx, ref_probs = _reference(hidden_states, attention_mask,
                                    wq, bq, wk, bk, wv, bv, num_heads)

    # 1) Default fast path: bf16 matmul inputs / scratch, approx reciprocal.
    ctx, probs = bert_self_attention(hidden_states, attention_mask,
                                     wq, bq, wk, bk, wv, bv,
                                     num_heads=num_heads)
    jax.block_until_ready((ctx, probs))
    assert ctx.shape == (B, S, H) and probs.shape == (B, num_heads, S, S)
    assert jnp.allclose(ctx, ref_ctx, atol=2e-2, rtol=2e-2)
    assert jnp.allclose(probs, ref_probs, atol=2e-2, rtol=2e-2)

    # 2) Full-precision path: matches the PyTorch module at tight tolerance.
    ctx32, probs32 = bert_self_attention(hidden_states, attention_mask,
                                         wq, bq, wk, bk, wv, bv,
                                         num_heads=num_heads,
                                         matmul_dtype=jnp.float32,
                                         approx_reciprocal=False)
    jax.block_until_ready((ctx32, probs32))
    assert jnp.allclose(ctx32, ref_ctx, atol=1e-5, rtol=1e-5)
    assert jnp.allclose(probs32, ref_probs, atol=1e-5, rtol=1e-5)

    # 3) Multi-q-tile path (block_q = 128 < S) with the v6e/v7x fast config
    #    (bf16 softmax elementwise stream + bf16 probs output).
    B2, S2, H2, heads2 = 1, 256, 128, 2
    k2 = jax.random.split(jax.random.PRNGKey(1), 9)
    hs2 = jax.random.normal(k2[0], (B2, S2, H2), dtype=jnp.float32)
    pad2 = (jax.random.uniform(k2[1], (B2, 1, 1, S2)) > 0.8).astype(jnp.float32)
    mask2 = pad2 * -10000.0
    wq2, wk2, wv2 = init(k2[2], (H2, H2)), init(k2[3], (H2, H2)), init(k2[4], (H2, H2))
    bq2, bk2, bv2 = init(k2[5], (H2,)), init(k2[6], (H2,)), init(k2[7], (H2,))

    ctx2, probs2 = bert_self_attention(hs2, mask2, wq2, bq2, wk2, bk2, wv2, bv2,
                                       num_heads=heads2,
                                       softmax_dtype=jnp.bfloat16,
                                       probs_dtype=jnp.bfloat16)
    jax.block_until_ready((ctx2, probs2))
    ref_ctx2, ref_probs2 = _reference(hs2, mask2, wq2, bq2, wk2, bk2, wv2, bv2,
                                      heads2)
    assert ctx2.shape == (B2, S2, H2)
    assert probs2.dtype == jnp.bfloat16
    assert jnp.allclose(ctx2, ref_ctx2, atol=2e-2, rtol=2e-2)
    assert jnp.allclose(probs2.astype(jnp.float32), ref_probs2, atol=2e-2, rtol=2e-2)

    print("KERNEL_OK")
</pallas_src>

<mosaic_0001>
module attributes {stable_mosaic.version = 11 : i64} {
  func.func @_bert_self_attention_kernel(%arg0: i32, %arg1: i32, %arg2: memref<1x8x32xbf16, #tpu.memory_space<vmem>>, %arg3: memref<1x8x32xbf16, #tpu.memory_space<vmem>>, %arg4: memref<1x1x1x8xf32, #tpu.memory_space<vmem>>, %arg5: memref<32x32xbf16, #tpu.memory_space<vmem>>, %arg6: memref<1x32xf32, #tpu.memory_space<vmem>>, %arg7: memref<32x64xbf16, #tpu.memory_space<vmem>>, %arg8: memref<1x64xf32, #tpu.memory_space<vmem>>, %arg9: memref<1x8x32xf32, #tpu.memory_space<vmem>>, %arg10: memref<1x4x8x8xf32, #tpu.memory_space<vmem>>, %arg11: memref<4x8x8xbf16, #tpu.memory_space<vmem>>, %arg12: memref<4x8x8xbf16, #tpu.memory_space<vmem>>) attributes {dimension_semantics = [#tpu.dimension_semantics<parallel>, #tpu.dimension_semantics<arbitrary>], iteration_bounds = array<i64: 2, 1>, scalar_prefetch = 0 : i64, scratch_operands = 2 : i64, tpu.core_type = #tpu.core_type<tc>, window_params = [{transform_indices = @transform_0, window_bounds = array<i64: 1, 8, 32>}, {transform_indices = @transform_1, window_bounds = array<i64: 1, 8, 32>}, {transform_indices = @transform_2, window_bounds = array<i64: 1, 1, 1, 8>}, {pipeline_mode = #tpu.pipeline_mode<synchronous>, transform_indices = @transform_3, window_bounds = array<i64: 32, 32>}, {pipeline_mode = #tpu.pipeline_mode<synchronous>, transform_indices = @transform_4, window_bounds = array<i64: 1, 32>}, {pipeline_mode = #tpu.pipeline_mode<synchronous>, transform_indices = @transform_5, window_bounds = array<i64: 32, 64>}, {pipeline_mode = #tpu.pipeline_mode<synchronous>, transform_indices = @transform_6, window_bounds = array<i64: 1, 64>}, {transform_indices = @transform_7, window_bounds = array<i64: 1, 8, 32>}, {transform_indices = @transform_8, window_bounds = array<i64: 1, 4, 8, 8>}]} {
    %c0_i32 = arith.constant 0 : i32
    %0 = arith.cmpi eq, %arg1, %c0_i32 : i32
    %1 = arith.extui %0 : i1 to i32
    %c0_i32_0 = arith.constant 0 : i32
    %2 = arith.cmpi ne, %1, %c0_i32_0 : i32
    scf.if %2 {
      %c0_28 = arith.constant 0 : index
      %c0_29 = arith.constant 0 : index
      %c0_30 = arith.constant 0 : index
      %43 = vector.load %arg2[%c0_28, %c0_29, %c0_30] : memref<1x8x32xbf16, #tpu.memory_space<vmem>>, vector<1x8x32xbf16>
      %44 = vector.shape_cast %43 : vector<1x8x32xbf16> to vector<8x32xbf16>
      %c0_31 = arith.constant 0 : index
      %c0_32 = arith.constant 0 : index
      %45 = vector.load %arg7[%c0_31, %c0_32] : memref<32x64xbf16, #tpu.memory_space<vmem>>, vector<32x64xbf16>
      %cst_33 = arith.constant dense<0.000000e+00> : vector<8x64xf32>
      %46 = tpu.matmul %44, %45, %cst_33 {dimension_numbers = #tpu.dot_dimension_numbers<[1], [0], [0], [1], [0, 0, 1, 1], [], []>} : vector<8x32xbf16>, vector<32x64xbf16>, vector<8x64xf32> -> vector<8x64xf32>
      %c0_34 = arith.constant 0 : index
      %c0_35 = arith.constant 0 : index
      %47 = vector.load %arg8[%c0_34, %c0_35] : memref<1x64xf32, #tpu.memory_space<vmem>>, vector<1x64xf32>
      %48 = vector.shape_cast %47 : vector<1x64xf32> to vector<64xf32>
      %49 = vector.shape_cast %48 : vector<64xf32> to vector<1x64xf32>
      %50 = vector.broadcast %49 : vector<1x64xf32> to vector<8x64xf32>
      %51 = arith.addf %46, %50 : vector<8x64xf32>
      %52 = vector.extract_strided_slice %51 {offsets = [0, 0], sizes = [8, 32], strides = [1, 1]} : vector<8x64xf32> to vector<8x32xf32>
      %53 = vector.shape_cast %52 : vector<8x32xf32> to vector<8x4x8xf32>
      %54 = tpu.transpose %53, [1, 0, 2] : vector<8x4x8xf32> -> vector<4x8x8xf32>
      %55 = arith.truncf %54 : vector<4x8x8xf32> to vector<4x8x8xbf16>
      %c0_36 = arith.constant 0 : index
      %c0_37 = arith.constant 0 : index
      %c0_38 = arith.constant 0 : index
      %56 = vector.load %arg11[%c0_36, %c0_37, %c0_38] : memref<4x8x8xbf16, #tpu.memory_space<vmem>>, vector<4x8x8xbf16>
      tpu.vector_store %arg11[%c0_36, %c0_37, %c0_38], %55 {strides = array<i32>} : memref<4x8x8xbf16, #tpu.memory_space<vmem>>, vector<4x8x8xbf16>,
      %57 = vector.extract_strided_slice %51 {offsets = [0, 32], sizes = [8, 32], strides = [1, 1]} : vector<8x64xf32> to vector<8x32xf32>
      %58 = vector.shape_cast %57 : vector<8x32xf32> to vector<8x4x8xf32>
      %59 = tpu.transpose %58, [1, 0, 2] : vector<8x4x8xf32> -> vector<4x8x8xf32>
      %60 = arith.truncf %59 : vector<4x8x8xf32> to vector<4x8x8xbf16>
      %c0_39 = arith.constant 0 : index
      %c0_40 = arith.constant 0 : index
      %c0_41 = arith.constant 0 : index
      %61 = vector.load %arg12[%c0_39, %c0_40, %c0_41] : memref<4x8x8xbf16, #tpu.memory_space<vmem>>, vector<4x8x8xbf16>
      tpu.vector_store %arg12[%c0_39, %c0_40, %c0_41], %60 {strides = array<i32>} : memref<4x8x8xbf16, #tpu.memory_space<vmem>>, vector<4x8x8xbf16>,
    } else {
    }
    %c0 = arith.constant 0 : index
    %c0_1 = arith.constant 0 : index
    %c0_2 = arith.constant 0 : index
    %3 = vector.load %arg3[%c0, %c0_1, %c0_2] : memref<1x8x32xbf16, #tpu.memory_space<vmem>>, vector<1x8x32xbf16>
    %4 = vector.shape_cast %3 : vector<1x8x32xbf16> to vector<8x32xbf16>
    %c0_3 = arith.constant 0 : index
    %c0_4 = arith.constant 0 : index
    %5 = vector.load %arg5[%c0_3, %c0_4] : memref<32x32xbf16, #tpu.memory_space<vmem>>, vector<32x32xbf16>
    %cst = arith.constant dense<0.000000e+00> : vector<8x32xf32>
    %6 = tpu.matmul %4, %5, %cst {dimension_numbers = #tpu.dot_dimension_numbers<[1], [0], [0], [1], [0, 0, 1, 1], [], []>} : vector<8x32xbf16>, vector<32x32xbf16>, vector<8x32xf32> -> vector<8x32xf32>
    %c0_5 = arith.constant 0 : index
    %c0_6 = arith.constant 0 : index
    %7 = vector.load %arg6[%c0_5, %c0_6] : memref<1x32xf32, #tpu.memory_space<vmem>>, vector<1x32xf32>
    %8 = vector.shape_cast %7 : vector<1x32xf32> to vector<32xf32>
    %9 = vector.shape_cast %8 : vector<32xf32> to vector<1x32xf32>
    %10 = vector.broadcast %9 : vector<1x32xf32> to vector<8x32xf32>
    %11 = arith.addf %6, %10 : vector<8x32xf32>
    %12 = vector.shape_cast %11 : vector<8x32xf32> to vector<8x4x8xf32>
    %13 = tpu.transpose %12, [1, 0, 2] : vector<8x4x8xf32> -> vector<4x8x8xf32>
    %14 = arith.truncf %13 : vector<4x8x8xf32> to vector<4x8x8xbf16>
    %c0_7 = arith.constant 0 : index
    %c0_8 = arith.constant 0 : index
    %c0_9 = arith.constant 0 : index
    %15 = vector.load %arg11[%c0_7, %c0_8, %c0_9] : memref<4x8x8xbf16, #tpu.memory_space<vmem>>, vector<4x8x8xbf16>
    "tpu.trace_start"() <{level = 10 : i32, message = "hqd,hkd->hqk"}> : () -> ()
    %cst_10 = arith.constant dense<0.000000e+00> : vector<4x8x8xf32>
    %16 = tpu.matmul %14, %15, %cst_10 {dimension_numbers = #tpu.dot_dimension_numbers<[2], [2], [1], [1], [0, 0, 0, 1, 1, 1], [0], [0]>} : vector<4x8x8xbf16>, vector<4x8x8xbf16>, vector<4x8x8xf32> -> vector<4x8x8xf32>
    "tpu.trace_stop"() : () -> ()
    %c0_11 = arith.constant 0 : index
    %c0_12 = arith.constant 0 : index
    %c0_13 = arith.constant 0 : index
    %c0_14 = arith.constant 0 : index
    %17 = vector.load %arg4[%c0_11, %c0_12, %c0_13, %c0_14] : memref<1x1x1x8xf32, #tpu.memory_space<vmem>>, vector<1x1x1x8xf32>
    %18 = vector.shape_cast %17 : vector<1x1x1x8xf32> to vector<1x8xf32>
    %19 = vector.shape_cast %18 : vector<1x8xf32> to vector<1x1x8xf32>
    %20 = vector.broadcast %19 : vector<1x1x8xf32> to vector<4x8x8xf32>
    %21 = arith.addf %16, %20 : vector<4x8x8xf32>
    %cst_15 = arith.constant dense<0xFF800000> : vector<4x8xf32>
    %22 = vector.multi_reduction <maximumf>, %21, %cst_15 [2] : vector<4x8x8xf32> to vector<4x8xf32>
    %23 = vector.shape_cast %22 : vector<4x8xf32> to vector<4x8x1xf32>
    %24 = vector.broadcast %23 : vector<4x8x1xf32> to vector<4x8x8xf32>
    %25 = arith.subf %21, %24 : vector<4x8x8xf32>
    %26 = math.exp %25 : vector<4x8x8xf32>
    %cst_16 = arith.constant dense<0.000000e+00> : vector<4x8xf32>
    %27 = vector.multi_reduction <add>, %26, %cst_16 [2] : vector<4x8x8xf32> to vector<4x8xf32>
    %28 = vector.shape_cast %27 : vector<4x8xf32> to vector<4x8x1xf32>
    %29 = tpu.reciprocal %28 {approx = true} : vector<4x8x1xf32> -> vector<4x8x1xf32>
    %30 = vector.broadcast %29 : vector<4x8x1xf32> to vector<4x8x8xf32>
    %31 = arith.mulf %26, %30 : vector<4x8x8xf32>
    %c0_17 = arith.constant 0 : index
    %c0_18 = arith.constant 0 : index
    %c0_19 = arith.constant 0 : index
    %c0_20 = arith.constant 0 : index
    %32 = vector.load %arg10[%c0_17, %c0_18, %c0_19, %c0_20] : memref<1x4x8x8xf32, #tpu.memory_space<vmem>>, vector<1x4x8x8xf32>
    %33 = vector.shape_cast %32 : vector<1x4x8x8xf32> to vector<4x8x8xf32>
    %34 = vector.shape_cast %31 : vector<4x8x8xf32> to vector<1x4x8x8xf32>
    tpu.vector_store %arg10[%c0_17, %c0_18, %c0_19, %c0_20], %34 {strides = array<i32>} : memref<1x4x8x8xf32, #tpu.memory_space<vmem>>, vector<1x4x8x8xf32>,
    %35 = arith.truncf %31 : vector<4x8x8xf32> to vector<4x8x8xbf16>
    %c0_21 = arith.constant 0 : index
    %c0_22 = arith.constant 0 : index
    %c0_23 = arith.constant 0 : index
    %36 = vector.load %arg12[%c0_21, %c0_22, %c0_23] : memref<4x8x8xbf16, #tpu.memory_space<vmem>>, vector<4x8x8xbf16>
    "tpu.trace_start"() <{level = 10 : i32, message = "hqk,hkd->hqd"}> : () -> ()
    %cst_24 = arith.constant dense<0.000000e+00> : vector<4x8x8xf32>
    %37 = tpu.matmul %35, %36, %cst_24 {dimension_numbers = #tpu.dot_dimension_numbers<[2], [1], [1], [2], [0, 0, 0, 1, 1, 2], [0], [0]>} : vector<4x8x8xbf16>, vector<4x8x8xbf16>, vector<4x8x8xf32> -> vector<4x8x8xf32>
    "tpu.trace_stop"() : () -> ()
    %38 = tpu.transpose %37, [1, 0, 2] : vector<4x8x8xf32> -> vector<8x4x8xf32>
    %39 = vector.shape_cast %38 : vector<8x4x8xf32> to vector<8x32xf32>
    %c0_25 = arith.constant 0 : index
    %c0_26 = arith.constant 0 : index
    %c0_27 = arith.constant 0 : index
    %40 = vector.load %arg9[%c0_25, %c0_26, %c0_27] : memref<1x8x32xf32, #tpu.memory_space<vmem>>, vector<1x8x32xf32>
    %41 = vector.shape_cast %40 : vector<1x8x32xf32> to vector<8x32xf32>
    %42 = vector.shape_cast %39 : vector<8x32xf32> to vector<1x8x32xf32>
    tpu.vector_store %arg9[%c0_25, %c0_26, %c0_27], %42 {strides = array<i32>} : memref<1x8x32xf32, #tpu.memory_space<vmem>>, vector<1x8x32xf32>,
    return
  }
  func.func @transform_0(%arg0: i32, %arg1: i32) -> (i32, i32, i32) {
    %c0_i32 = arith.constant 0 : i32
    %c0_i32_0 = arith.constant 0 : i32
    %c0_i32_1 = arith.constant 0 : i32
    return %arg0, %c0_i32, %c0_i32_0 : i32, i32, i32
  }
  func.func @transform_1(%arg0: i32, %arg1: i32) -> (i32, i32, i32) {
    %c0_i32 = arith.constant 0 : i32
    %c0_i32_0 = arith.constant 0 : i32
    return %arg0, %arg1, %c0_i32 : i32, i32, i32
  }
  func.func @transform_2(%arg0: i32, %arg1: i32) -> (i32, i32, i32, i32) {
    %c0_i32 = arith.constant 0 : i32
    %c0_i32_0 = arith.constant 0 : i32
    %c0_i32_1 = arith.constant 0 : i32
    %c0_i32_2 = arith.constant 0 : i32
    return %arg0, %c0_i32, %c0_i32_0, %c0_i32_1 : i32, i32, i32, i32
  }
  func.func @transform_3(%arg0: i32, %arg1: i32) -> (i32, i32) {
    %c0_i32 = arith.constant 0 : i32
    %c0_i32_0 = arith.constant 0 : i32
    %c0_i32_1 = arith.constant 0 : i32
    return %c0_i32, %c0_i32_0 : i32, i32
  }
  func.func @transform_4(%arg0: i32, %arg1: i32) -> (i32, i32) {
    %c0_i32 = arith.constant 0 : i32
    %c0_i32_0 = arith.constant 0 : i32
    %c0_i32_1 = arith.constant 0 : i32
    return %c0_i32, %c0_i32_0 : i32, i32
  }
  func.func @transform_5(%arg0: i32, %arg1: i32) -> (i32, i32) {
    %c0_i32 = arith.constant 0 : i32
    %c0_i32_0 = arith.constant 0 : i32
    %c0_i32_1 = arith.constant 0 : i32
    return %c0_i32, %c0_i32_0 : i32, i32
  }
  func.func @transform_6(%arg0: i32, %arg1: i32) -> (i32, i32) {
    %c0_i32 = arith.constant 0 : i32
    %c0_i32_0 = arith.constant 0 : i32
    %c0_i32_1 = arith.constant 0 : i32
    return %c0_i32, %c0_i32_0 : i32, i32
  }
  func.func @transform_7(%arg0: i32, %arg1: i32) -> (i32, i32, i32) {
    %c0_i32 = arith.constant 0 : i32
    %c0_i32_0 = arith.constant 0 : i32
    return %arg0, %arg1, %c0_i32 : i32, i32, i32
  }
  func.func @transform_8(%arg0: i32, %arg1: i32) -> (i32, i32, i32, i32) {
    %c0_i32 = arith.constant 0 : i32
    %c0_i32_0 = arith.constant 0 : i32
    %c0_i32_1 = arith.constant 0 : i32
    return %arg0, %c0_i32, %arg1, %c0_i32_0 : i32, i32, i32, i32
  }
}

</mosaic_0001>

<llo_original>
// kernel: tpu_custom_call.1
$region0: #{tpu_custom_call.1}
  #allocation0 [shape = 'u32[]', space=smem, size = 0x4, offset = 0x4, fixed_abs, tag = 'smem constant byte address 0x4 - core index']
  #allocation1 [shape = 'u32[144,128]{1,0:T(1,128)}', space=vmem, size = 0x12000, scoped, tag = 'internal scratch']
  #allocation2 [shape = 'bf16[4,8,8]{2,1,0:T(8,128)(2,1)}', space=vmem, size = 0x2000, scoped, tag = 'scratch operand']
  #allocation3 [shape = 'bf16[4,8,8]{2,1,0:T(8,128)(2,1)}', space=vmem, size = 0x2000, scoped, tag = 'scratch operand']
  %s0 = inlined_call_operand.hbm [shape: bf16[2,8,32], index: 0, kind: input, shape index: {}]
  %s1 = inlined_call_operand.hbm [shape: bf16[2,8,32], index: 1, kind: input, shape index: {}]
  %s2 = inlined_call_operand.vmem [shape: f32[2,1,1,8], index: 2, kind: input, shape index: {}]
  %s3 = inlined_call_operand.hbm [shape: bf16[32,32], index: 3, kind: input, shape index: {}]
  %s4 = inlined_call_operand.hbm [shape: f32[1,32], index: 4, kind: input, shape index: {}]
  %s5 = inlined_call_operand.vmem [shape: bf16[32,64], index: 5, kind: input, shape index: {}]
  %s6 = inlined_call_operand.vmem [shape: f32[1,64], index: 6, kind: input, shape index: {}]
  %s7 = inlined_call_operand.hbm [shape: f32[2,8,32], index: 7, kind: output, shape index: {0}]
  %s8 = inlined_call_operand.hbm [shape: f32[2,4,8,8], index: 8, kind: output, shape index: {1}]
  %9 = xla_tuple %s7, %s8
  %s10 = sld [smem:[#allocation0]]
  $region89: #{tpu_custom_call.1} parent=0
    _
  %s12 = ssub.s32 1, %s10
  %s13 = scalar_select 0, %s12, %s10
  $region1: #{tpu_custom_call.1} parent=0
    #allocation4 [shape = 'u8[4096]{0}', space=vmem, size = 0x1000, scoped, tag = 'input window, operand 0']
    #allocation5 [shape = 's32[2]{0}', space=sflag, size = 0x8, scoped, tag = 'scoped memory for tpu_custom_call.1']
    #allocation6 [shape = 's32[2]{0}', space=sflag, size = 0x8, scoped, tag = 'scoped memory for tpu_custom_call.1']
    #allocation7 [shape = 'u8[4096]{0}', space=vmem, size = 0x1000, scoped, tag = 'input window, operand 1']
    #allocation8 [shape = 's32[2]{0}', space=sflag, size = 0x8, scoped, tag = 'scoped memory for tpu_custom_call.1']
    #allocation9 [shape = 'u8[8192]{0}', space=vmem, size = 0x2000, scoped, tag = 'input window, operand 3, single buffered']
    #allocation10 [shape = 'u8[512]{0}', space=vmem, size = 0x400, scoped, tag = 'input window, operand 4, single buffered']
    #allocation11 [shape = 's32[1]{0}', space=sflag, size = 0x4, scoped, tag = 'scoped memory for tpu_custom_call.1']
    #allocation12 [shape = 'u8[8192]{0}', space=vmem, size = 0x2000, scoped, tag = 'output window, operand 0']
    #allocation13 [shape = 'u8[32768]{0}', space=vmem, size = 0x8000, scoped, tag = 'output window, operand 1']
    #allocation14 [shape = 's32[2]{0}', space=sflag, size = 0x8, scoped, tag = 'scoped memory for tpu_custom_call.1']
    %14 = vsyncpa [#allocation5], 0
    %s15 = scalar_lea.sflag [#allocation5], 1
    %16 = vsyncpa %s15, 0
    %17 = vsyncpa [#allocation8], 0
    %s18 = scalar_lea.sflag [#allocation8], 1
    %19 = vsyncpa %s18, 0
    %20 = vsyncpa [#allocation11], 0
    %21 = vsyncpa [#allocation6], 0
    %s22 = scalar_lea.sflag [#allocation6], 1
    %23 = vsyncpa %s22, 0
    %24 = vsyncpa [#allocation14], 0
    %s25 = scalar_lea.sflag [#allocation14], 1
    %26 = vsyncpa %s25, 0
    loop: start=0, step=1, limit=4
    $region2: #{tpu_custom_call.1} parent=1 // loop_pre_header
      _
    $region3: #{tpu_custom_call.1} parent=1 // loop_header
      %s28 = sphi 0, %s32
      %p29 = scmp.ge.s32.totalorder %s28, 4
      %s35 = sphi 0, %s47
      %s36 = sphi 0, %s43
      %s37 = sphi 0, %s35
      %s38 = sphi 0, %s36
      %s39 = sphi 0, %s37
      %s40 = sphi 0, %s38
      %s50 = sphi 0, %s52
      %s53 = sphi 0, %s50
      %s54 = sphi 0, %s53
      %s70 = sphi 0, %s54
      %s78 = sphi 0, %s80
      %s81 = sphi 0, %s78
      %s82 = sphi 0, %s81
      %s98 = sphi 0, %s82
      %s104 = sphi 0, %s106
      %s107 = sphi 0, %s104
      %s108 = sphi 0, %s107
      %s124 = sphi 0, %s108
      %s128 = sphi 0, %s128
      %s130 = sphi 0, %s128
      %s131 = sphi 0, %s130
      %s145 = sphi 0, %s131
      %s149 = sphi 0, %s149
      %s151 = sphi 0, %s149
      %s152 = sphi 0, %s151
      %s166 = sphi 0, %s152
      %s170 = sphi 0, %s170
      %s172 = sphi 0, %s170
      %s173 = sphi 0, %s172
      %s187 = sphi 0, %s173
      %s191 = sphi 0, %s191
      %s193 = sphi 0, %s191
      %s194 = sphi 0, %s193
      %s208 = sphi 0, %s194
      %s216 = sphi 0, %s218
      %s219 = sphi 0, %s216
      %s220 = sphi 0, %s219
      %s236 = sphi 0, %s220
      %s244 = sphi 0, %s246
      %s247 = sphi 0, %s244
      %s248 = sphi 0, %s247
      %s264 = sphi 0, %s248
    $region4: #{tpu_custom_call.1} parent=1 // loop_header_branch
      %31 = sbr.rel (%p29) target = $region8
    $region5: #{tpu_custom_call.1} parent=1 // loop_body
      %s33 = ssub.s32 %s28, 1
      %s34 = ssub.s32 %s28, 2
      %s41 = sadd.s32 1, %s36
      %p42 = scmp.ge.s32.totalorder %s41, 1
      %s43 = scalar_select %p42, 0, %s41
      %s44 = sadd.s32 1, %s35
      %s45 = scalar_select %p42, %s44, %s35
      %p46 = scmp.ge.s32.totalorder %s45, 2
      %s47 = scalar_select %p46, 0, %s45
      %s48 = ssub.s32 %s35, %s47
      %p49 = scmp.eq.s32.totalorder %s48, 0
      %s51 = sadd.s32 %s50, 1
      %s52 = scalar_select %p49, %s50, %s51
      %p55 = pneg %p49
      %p56 = scmp.eq.s32.totalorder %s28, 1
      %p57 = por %p55, %p56
      %p58 = scmp.ne.s32.totalorder %s50, %s53
      %p59 = scmp.eq.s32.totalorder %s28, 0
      %p60 = por %p58, %p59
      %p61 = scmp.ne.s32.totalorder %s50, %s53
      %p62 = scmp.eq.s32.totalorder %s33, 1
      %p63 = por %p61, %p62
      %p64 = scmp.ne.s32.totalorder %s53, %s54
      %p65 = scmp.eq.s32.totalorder %s33, 0
      %p66 = por %p64, %p65
      %p67 = scmp.ne.s32.totalorder %s53, %s54
      %p68 = scmp.eq.s32.totalorder %s34, 1
      %p69 = por %p67, %p68
      %p71 = scmp.ne.s32.totalorder %s54, %s70
      %p72 = scmp.eq.s32.totalorder %s34, 0
      %p73 = por %p71, %p72
      %s74 = ssub.s32 %s35, %s47
      %s75 = ssub.s32 %s36, %s43
      %s76 = sor.u32 %s74, %s75
      %p77 = scmp.eq.s32.totalorder %s76, 0
      %s79 = sadd.s32 %s78, 1
      %s80 = scalar_select %p77, %s78, %s79
      %p83 = pneg %p77
      %p84 = scmp.eq.s32.totalorder %s28, 1
      %p85 = por %p83, %p84
      %p86 = scmp.ne.s32.totalorder %s78, %s81
      %p87 = scmp.eq.s32.totalorder %s28, 0
      %p88 = por %p86, %p87
      %p89 = scmp.ne.s32.totalorder %s78, %s81
      %p90 = scmp.eq.s32.totalorder %s33, 1
      %p91 = por %p89, %p90
      %p92 = scmp.ne.s32.totalorder %s81, %s82
      %p93 = scmp.eq.s32.totalorder %s33, 0
      %p94 = por %p92, %p93
      %p95 = scmp.ne.s32.totalorder %s81, %s82
      %p96 = scmp.eq.s32.totalorder %s34, 1
      %p97 = por %p95, %p96
      %p99 = scmp.ne.s32.totalorder %s82, %s98
      %p100 = scmp.eq.s32.totalorder %s34, 0
      %p101 = por %p99, %p100
      %s102 = ssub.s32 %s35, %s47
      %p103 = scmp.eq.s32.totalorder %s102, 0
      %s105 = sadd.s32 %s104, 1
      %s106 = scalar_select %p103, %s104, %s105
      %p109 = pneg %p103
      %p110 = scmp.eq.s32.totalorder %s28, 1
      %p111 = por %p109, %p110
      %p112 = scmp.ne.s32.totalorder %s104, %s107
      %p113 = scmp.eq.s32.totalorder %s28, 0
      %p114 = por %p112, %p113
      %p115 = scmp.ne.s32.totalorder %s104, %s107
      %p116 = scmp.eq.s32.totalorder %s33, 1
      %p117 = por %p115, %p116
      %p118 = scmp.ne.s32.totalorder %s107, %s108
      %p119 = scmp.eq.s32.totalorder %s33, 0
      %p120 = por %p118, %p119
      %p121 = scmp.ne.s32.totalorder %s107, %s108
      %p122 = scmp.eq.s32.totalorder %s34, 1
      %p123 = por %p121, %p122
      %p125 = scmp.ne.s32.totalorder %s108, %s124
      %p126 = scmp.eq.s32.totalorder %s34, 0
      %p127 = por %p125, %p126
      %s129 = sadd.s32 %s128, 1
      %p132 = scmp.eq.s32.totalorder %s28, 1
      %p133 = scmp.ne.s32.totalorder %s128, %s130
      %p134 = scmp.eq.s32.totalorder %s28, 0
      %p135 = por %p133, %p134
      %p136 = scmp.ne.s32.totalorder %s128, %s130
      %p137 = scmp.eq.s32.totalorder %s33, 1
      %p138 = por %p136, %p137
      %p139 = scmp.ne.s32.totalorder %s130, %s131
      %p140 = scmp.eq.s32.totalorder %s33, 0
      %p141 = por %p139, %p140
      %p142 = scmp.ne.s32.totalorder %s130, %s131
      %p143 = scmp.eq.s32.totalorder %s34, 1
      %p144 = por %p142, %p143
      %p146 = scmp.ne.s32.totalorder %s131, %s145
      %p147 = scmp.eq.s32.totalorder %s34, 0
      %p148 = por %p146, %p147
      %s150 = sadd.s32 %s149, 1
      %p153 = scmp.eq.s32.totalorder %s28, 1
      %p154 = scmp.ne.s32.totalorder %s149, %s151
      %p155 = scmp.eq.s32.totalorder %s28, 0
      %p156 = por %p154, %p155
      %p157 = scmp.ne.s32.totalorder %s149, %s151
      %p158 = scmp.eq.s32.totalorder %s33, 1
      %p159 = por %p157, %p158
      %p160 = scmp.ne.s32.totalorder %s151, %s152
      %p161 = scmp.eq.s32.totalorder %s33, 0
      %p162 = por %p160, %p161
      %p163 = scmp.ne.s32.totalorder %s151, %s152
      %p164 = scmp.eq.s32.totalorder %s34, 1
      %p165 = por %p163, %p164
      %p167 = scmp.ne.s32.totalorder %s152, %s166
      %p168 = scmp.eq.s32.totalorder %s34, 0
      %p169 = por %p167, %p168
      %s171 = sadd.s32 %s170, 1
      %p174 = scmp.eq.s32.totalorder %s28, 1
      %p175 = scmp.ne.s32.totalorder %s170, %s172
      %p176 = scmp.eq.s32.totalorder %s28, 0
      %p177 = por %p175, %p176
      %p178 = scmp.ne.s32.totalorder %s170, %s172
      %p179 = scmp.eq.s32.totalorder %s33, 1
      %p180 = por %p178, %p179
      %p181 = scmp.ne.s32.totalorder %s172, %s173
      %p182 = scmp.eq.s32.totalorder %s33, 0
      %p183 = por %p181, %p182
      %p184 = scmp.ne.s32.totalorder %s172, %s173
      %p185 = scmp.eq.s32.totalorder %s34, 1
      %p186 = por %p184, %p185
      %p188 = scmp.ne.s32.totalorder %s173, %s187
      %p189 = scmp.eq.s32.totalorder %s34, 0
      %p190 = por %p188, %p189
      %s192 = sadd.s32 %s191, 1
      %p195 = scmp.eq.s32.totalorder %s28, 1
      %p196 = scmp.ne.s32.totalorder %s191, %s193
      %p197 = scmp.eq.s32.totalorder %s28, 0
      %p198 = por %p196, %p197
      %p199 = scmp.ne.s32.totalorder %s191, %s193
      %p200 = scmp.eq.s32.totalorder %s33, 1
      %p201 = por %p199, %p200
      %p202 = scmp.ne.s32.totalorder %s193, %s194
      %p203 = scmp.eq.s32.totalorder %s33, 0
      %p204 = por %p202, %p203
      %p205 = scmp.ne.s32.totalorder %s193, %s194
      %p206 = scmp.eq.s32.totalorder %s34, 1
      %p207 = por %p205, %p206
      %p209 = scmp.ne.s32.totalorder %s194, %s208
      %p210 = scmp.eq.s32.totalorder %s34, 0
      %p211 = por %p209, %p210
      %s212 = ssub.s32 %s35, %s47
      %s213 = ssub.s32 %s36, %s43
      %s214 = sor.u32 %s212, %s213
      %p215 = scmp.eq.s32.totalorder %s214, 0
      %s217 = sadd.s32 %s216, 1
      %s218 = scalar_select %p215, %s216, %s217
      %p221 = pneg %p215
      %p222 = scmp.eq.s32.totalorder %s28, 1
      %p223 = por %p221, %p222
      %p224 = scmp.ne.s32.totalorder %s216, %s219
      %p225 = scmp.eq.s32.totalorder %s28, 0
      %p226 = por %p224, %p225
      %p227 = scmp.ne.s32.totalorder %s216, %s219
      %p228 = scmp.eq.s32.totalorder %s33, 1
      %p229 = por %p227, %p228
      %p230 = scmp.ne.s32.totalorder %s219, %s220
      %p231 = scmp.eq.s32.totalorder %s33, 0
      %p232 = por %p230, %p231
      %p233 = scmp.ne.s32.totalorder %s219, %s220
      %p234 = scmp.eq.s32.totalorder %s34, 1
      %p235 = por %p233, %p234
      %p237 = scmp.ne.s32.totalorder %s220, %s236
      %p238 = scmp.eq.s32.totalorder %s34, 0
      %p239 = por %p237, %p238
      %s240 = ssub.s32 %s35, %s47
      %s241 = ssub.s32 %s36, %s43
      %s242 = sor.u32 %s240, %s241
      %p243 = scmp.eq.s32.totalorder %s242, 0
      %s245 = sadd.s32 %s244, 1
      %s246 = scalar_select %p243, %s244, %s245
      %p249 = pneg %p243
      %p250 = scmp.eq.s32.totalorder %s28, 1
      %p251 = por %p249, %p250
      %p252 = scmp.ne.s32.totalorder %s244, %s247
      %p253 = scmp.eq.s32.totalorder %s28, 0
      %p254 = por %p252, %p253
      %p255 = scmp.ne.s32.totalorder %s244, %s247
      %p256 = scmp.eq.s32.totalorder %s33, 1
      %p257 = por %p255, %p256
      %p258 = scmp.ne.s32.totalorder %s247, %s248
      %p259 = scmp.eq.s32.totalorder %s33, 0
      %p260 = por %p258, %p259
      %p261 = scmp.ne.s32.totalorder %s247, %s248
      %p262 = scmp.eq.s32.totalorder %s34, 1
      %p263 = por %p261, %p262
      %p265 = scmp.ne.s32.totalorder %s248, %s264
      %p266 = scmp.eq.s32.totalorder %s34, 0
      %p267 = por %p265, %p266
      %p268 = scmp.le.s32.totalorder 1, %s28
      %p269 = scmp.lt.s32.totalorder %s28, 3
      %p270 = pnand %p268, %p269
      %p271 = pneg %p270
      // Predicated region
      $region9: #{tpu_custom_call.1} parent=5 // pred_check
        _
      $region10: #{tpu_custom_call.1} parent=5 // pred_check_branch
        %273 = sbr.rel (%p270) target = $region12
      $region11: #{tpu_custom_call.1} parent=5 // pred_region
        %s274 = ssub.s32 %s28, 1
        // Predicated region
        $region13: #{tpu_custom_call.1} parent=11 // pred_check
          %p275 = pneg %p141
        $region14: #{tpu_custom_call.1} parent=11 // pred_check_branch
          %277 = sbr.rel (%p275) target = $region16
        $region15: #{tpu_custom_call.1} parent=11 // pred_region
          %s279 = ssub.s32 256, 256
          %280 = vsyncadd [#allocation8], %s279
          %s281 = sshll.u32 [#allocation9], 4
          %s282 = int_to_ptr.vmem [resolvable:$true] %s281
          %287 = dma.hbm_to_vmem [thread:$0]  %s3, 256, %s282, [#allocation8], 64, 64, 4
        $region16: #{tpu_custom_call.1} parent=11 // pred_fallthru
          _
        // Predicated region
        $region17: #{tpu_custom_call.1} parent=11 // pred_check
          %p288 = pneg %p162
        $region18: #{tpu_custom_call.1} parent=11 // pred_check_branch
          %290 = sbr.rel (%p288) target = $region20
        $region19: #{tpu_custom_call.1} parent=11 // pred_region
          %s292 = ssub.s32 16, 16
          %293 = vsyncadd [#allocation11], %s292
          %s295 = sshll.u32 [#allocation10], 4
          %s296 = int_to_ptr.vmem [resolvable:$true] %s295
          %298 = dma.hbm_to_vmem [thread:$0]  %s4, 16, %s296, [#allocation11]
        $region20: #{tpu_custom_call.1} parent=11 // pred_fallthru
          _
        // Predicated region
        $region21: #{tpu_custom_call.1} parent=11 // pred_check
          %p299 = pneg %p183
        $region22: #{tpu_custom_call.1} parent=11 // pred_check_branch
          %301 = sbr.rel (%p299) target = $region24
        $region23: #{tpu_custom_call.1} parent=11 // pred_region
          _
        $region24: #{tpu_custom_call.1} parent=11 // pred_fallthru
          _
        // Predicated region
        $region25: #{tpu_custom_call.1} parent=11 // pred_check
          %p302 = pneg %p204
        $region26: #{tpu_custom_call.1} parent=11 // pred_check_branch
          %304 = sbr.rel (%p302) target = $region28
        $region27: #{tpu_custom_call.1} parent=11 // pred_region
          _
        $region28: #{tpu_custom_call.1} parent=11 // pred_fallthru
          _
      $region12: #{tpu_custom_call.1} parent=5 // pred_fallthru
        _
      %p305 = scmp.lt.s32.totalorder %s28, 2
      // Predicated region
      $region29: #{tpu_custom_call.1} parent=5 // pred_check
        %p306 = pneg %p305
      $region30: #{tpu_custom_call.1} parent=5 // pred_check_branch
        %308 = sbr.rel (%p306) target = $region32
      $region31: #{tpu_custom_call.1} parent=5 // pred_region
        // Predicated region
        $region33: #{tpu_custom_call.1} parent=31 // pred_check
          %p309 = pneg %p60
        $region34: #{tpu_custom_call.1} parent=31 // pred_check_branch
          %311 = sbr.rel (%p309) target = $region36
        $region35: #{tpu_custom_call.1} parent=31 // pred_region
          %s312 = sand.u32 %s50, 1
          %s313 = scalar_lea.sflag [#allocation5], %s312
          %s314 = sand.u32 %s50, 1
          %s315 = smul.addr %s314, 4
          %s316 = scalar_lea.vmem [#allocation4], %s315
          %s318 = ssub.s32 64, 64
          %319 = vsyncadd %s313, %s318
          %s320 = smul.addr %s35, 64
          %s321 = scalar_lea.hbm %s0, %s320
          %s323 = sshll.u32 %s316, 4
          %s324 = int_to_ptr.vmem [resolvable:$true] %s323
          %326 = dma.hbm_to_vmem [thread:$0]  %s321, 64, %s324, %s313
        $region36: #{tpu_custom_call.1} parent=31 // pred_fallthru
          _
        // Predicated region
        $region37: #{tpu_custom_call.1} parent=31 // pred_check
          %p327 = pneg %p88
        $region38: #{tpu_custom_call.1} parent=31 // pred_check_branch
          %329 = sbr.rel (%p327) target = $region40
        $region39: #{tpu_custom_call.1} parent=31 // pred_region
          %s330 = sand.u32 %s28, 1
          %s331 = scalar_lea.sflag [#allocation8], %s330
          %s332 = sand.u32 %s78, 1
          %s333 = smul.addr %s332, 4
          %s334 = scalar_lea.vmem [#allocation7], %s333
          %s336 = ssub.s32 64, 64
          %337 = vsyncadd %s331, %s336
          %s338 = sadd.s32 %s36, %s35
          %s339 = smul.addr %s338, 64
          %s340 = scalar_lea.hbm %s1, %s339
          %s342 = sshll.u32 %s334, 4
          %s343 = int_to_ptr.vmem [resolvable:$true] %s342
          %345 = dma.hbm_to_vmem [thread:$0]  %s340, 64, %s343, %s331
        $region40: #{tpu_custom_call.1} parent=31 // pred_fallthru
          _
        // Predicated region
        $region41: #{tpu_custom_call.1} parent=31 // pred_check
          %p346 = pneg %p114
        $region42: #{tpu_custom_call.1} parent=31 // pred_check_branch
          %348 = sbr.rel (%p346) target = $region44
        $region43: #{tpu_custom_call.1} parent=31 // pred_region
          %p349 = scmp.lt.s32.totalorder %s35, 1
          %s350 = scalar_select %p349, %s35, 1
          %s351 = scalar_lea.vmem %s2, %s350
        $region44: #{tpu_custom_call.1} parent=31 // pred_fallthru
          _
      $region32: #{tpu_custom_call.1} parent=5 // pred_fallthru
        _
      %p352 = scmp.le.s32.totalorder 1, %s28
      %p353 = scmp.lt.s32.totalorder %s28, 3
      %p354 = pnand %p352, %p353
      %p355 = pneg %p354
      // Predicated region
      $region45: #{tpu_custom_call.1} parent=5 // pred_check
        _
      $region46: #{tpu_custom_call.1} parent=5 // pred_check_branch
        %357 = sbr.rel (%p354) target = $region48
      $region47: #{tpu_custom_call.1} parent=5 // pred_region
        %s358 = ssub.s32 %s28, 1
        %s359 = sand.u32 %s53, 1
        %s360 = scalar_lea.sflag [#allocation5], %s359
        %s361 = sand.u32 %s53, 1
        %s362 = smul.addr %s361, 4
        %s363 = scalar_lea.vmem [#allocation4], %s362
        // Predicated region
        $region49: #{tpu_custom_call.1} parent=47 // pred_check
          %p364 = pneg %p66
        $region50: #{tpu_custom_call.1} parent=47 // pred_check_branch
          %366 = sbr.rel (%p364) target = $region52
        $region51: #{tpu_custom_call.1} parent=47 // pred_region
          %367 = dma.done %s360, 64
        $region52: #{tpu_custom_call.1} parent=47 // pred_fallthru
          _
        %s368 = sand.u32 %s33, 1
        %s369 = scalar_lea.sflag [#allocation8], %s368
        %s370 = sand.u32 %s81, 1
        %s371 = smul.addr %s370, 4
        %s372 = scalar_lea.vmem [#allocation7], %s371
        // Predicated region
        $region53: #{tpu_custom_call.1} parent=47 // pred_check
          %p373 = pneg %p94
        $region54: #{tpu_custom_call.1} parent=47 // pred_check_branch
          %375 = sbr.rel (%p373) target = $region56
        $region55: #{tpu_custom_call.1} parent=47 // pred_region
          %376 = dma.done %s369, 64
        $region56: #{tpu_custom_call.1} parent=47 // pred_fallthru
          _
        // Predicated region
        $region57: #{tpu_custom_call.1} parent=47 // pred_check
          %p377 = pneg %p141
        $region58: #{tpu_custom_call.1} parent=47 // pred_check_branch
          %379 = sbr.rel (%p377) target = $region60
        $region59: #{tpu_custom_call.1} parent=47 // pred_region
          %380 = dma.done [#allocation8], 256
        $region60: #{tpu_custom_call.1} parent=47 // pred_fallthru
          _
        // Predicated region
        $region61: #{tpu_custom_call.1} parent=47 // pred_check
          %p381 = pneg %p162
        $region62: #{tpu_custom_call.1} parent=47 // pred_check_branch
          %383 = sbr.rel (%p381) target = $region64
        $region63: #{tpu_custom_call.1} parent=47 // pred_region
          %384 = dma.done [#allocation11], 16
        $region64: #{tpu_custom_call.1} parent=47 // pred_fallthru
          _
        %s385 = sand.u32 %s53, 1
        %s386 = scalar_lea.sflag [#allocation5], %s385
        %s387 = sand.u32 %s53, 1
        %s388 = smul.addr %s387, 4
        %s389 = scalar_lea.vmem [#allocation4], %s388
        %p390 = pneg %p66
        %p391 = pneg %p63
        %s392 = sand.u32 %s33, 1
        %s393 = scalar_lea.sflag [#allocation8], %s392
        %s394 = sand.u32 %s81, 1
        %s395 = smul.addr %s394, 4
        %s396 = scalar_lea.vmem [#allocation7], %s395
        %p397 = pneg %p94
        %p398 = pneg %p91
        %p399 = scmp.lt.s32.totalorder %s37, 1
        %s400 = scalar_select %p399, %s37, 1
        %s401 = scalar_lea.vmem %s2, %s400
        %p402 = pneg %p120
        %p403 = pneg %p117
        %p404 = pneg %p141
        %p405 = pneg %p138
        %p406 = pneg %p162
        %p407 = pneg %p159
        %p408 = pneg %p183
        %p409 = pneg %p180
        %p410 = pneg %p204
        %p411 = pneg %p201
        %p412 = pneg %p232
        %p413 = pneg %p229
        %s414 = sand.u32 %s219, 1
        %s415 = scalar_lea.sflag [#allocation6], %s414
        %s416 = sand.u32 %s219, 1
        %s417 = smul.addr %s416, 8
        %s418 = scalar_lea.vmem [#allocation12], %s417
        %p419 = pneg %p260
        %p420 = pneg %p257
        %s421 = sand.u32 %s247, 1
        %s422 = scalar_lea.sflag [#allocation14], %s421
        %s423 = sand.u32 %s247, 1
        %s424 = smul.addr %s423, 32
        %s425 = scalar_lea.vmem [#allocation13], %s424
        %p426 = scmp.lt.s32.totalorder %s37, 1
        %s427 = scalar_select %p426, %s37, 1
        %s428 = scalar_lea.vmem %s2, %s427
        %p430 = scmp.eq.s32.totalorder %s38, 0
        // Predicated region
        $region65: #{tpu_custom_call.1} parent=47 // pred_check
          %p431 = pneg %p430
        $region66: #{tpu_custom_call.1} parent=47 // pred_check_branch
          %433 = sbr.rel (%p431) target = $region68
        $region67: #{tpu_custom_call.1} parent=47 // pred_region
          %v434 = vld [vmem:[%s363] sm:$0xf]
          %v435 = vld [vmem:[%s5] sm:$0xf]
          %v436 = vld [vmem:[%s5 + $0x4] sm:$0xf]
          %v437 = vld [vmem:[%s5 + $0x8] sm:$0xf]
          %v438 = vld [vmem:[%s5 + $0xc] sm:$0xf]
          %v439 = vld [vmem:[%s6] sm:$0x1]
          %v441 = vlaneseq
          %v442 = vshrl.u32 %v441, 7
          %v443 = vsub.s32 0, %v442
          %v444 = vrot.slane %v439, %v443
          %v450 = vunpack.c.l.b16 %v435
          %v451 = vunpack.c.l.b16 %v436
          %v452 = vunpack.c.l.b16 %v437
          %v453 = vunpack.c.l.b16 %v438
          %v454 = vpack.c.b16 %v451, %v450
          %v455 = vpack.c.b16 %v453, %v452
          %vm458 = vcmask 261120
          %v460 = vsel %vm458, %v434, 0
          %462 = vmatprep.subr.bf16.mxu0 0
          %463 = vmatpush1.bf16.msra.mxu0 %v454
          %464 = vmatprep.subr.bf16.mxu0 0
          %465 = vmatpush1.bf16.msra.mxu0 %v455
          %466 = vmatprep.subr.bf16.mxu0 0
          %467 = vmatpush1.bf16.msra.mxu0 0
          %468 = vmatprep.subr.bf16.mxu0 0
          %469 = vmatpush1.bf16.msra.mxu0 0
          %470 = vmatprep.subr.bf16.mxu0 0
          %471 = vmatpush1.bf16.msra.mxu0 0
          %472 = vmatprep.subr.bf16.mxu0 0
          %473 = vmatpush1.bf16.msra.mxu0 0
          %474 = vmatprep.subr.bf16.mxu0 0
          %475 = vmatpush1.bf16.msra.mxu0 0
          %476 = vmatprep.subr.bf16.mxu0 0
          %477 = vmatpush1.bf16.msra.mxu0 0
          %478 = vmatprep.subr.bf16.mxu0 0
          %479 = vmatpush1.bf16.msra.mxu0 0
          %480 = vmatprep.subr.bf16.mxu0 0
          %481 = vmatpush1.bf16.msra.mxu0 0
          %482 = vmatprep.subr.bf16.mxu0 0
          %483 = vmatpush1.bf16.msra.mxu0 0
          %484 = vmatprep.subr.bf16.mxu0 0
          %485 = vmatpush1.bf16.msra.mxu0 0
          %486 = vmatprep.subr.bf16.mxu0 0
          %487 = vmatpush1.bf16.msra.mxu0 0
          %488 = vmatprep.subr.bf16.mxu0 0
          %489 = vmatpush1.bf16.msra.mxu0 0
          %490 = vmatprep.subr.bf16.mxu0 0
          %491 = vmatpush1.bf16.msra.mxu0 0
          %492 = vmatprep.subr.bf16.mxu0 0
          %493 = vmatpush1.bf16.msra.mxu0 0
          %494 = vmatprep.mubr.bf16.mxu0 0
          %495 = vmatmul.mubr.bf16.gmra.mrb[0].mxu0 %v460
          %v496 = vpop.f32.mrb[0].mxu0
          %v497 = vadd.f32 %v444, %v496
          %v498 = vpop.f32.mrb[0].mxu0
          %v499 = vpop.f32.mrb[0].mxu0
          %v500 = vpop.f32.mrb[0].mxu0
          %501 = vdwg.mxu0
          %503 = vrot.lane.b32.xlu0 %v497, 120
          %v504 = vpop.permute.xlu0 %503
          %506 = vrot.lane.b32.xlu0 %v497, 112
          %v507 = vpop.permute.xlu0 %506
          %509 = vrot.lane.b32.xlu0 %v497, 104
          %v510 = vpop.permute.xlu0 %509
          %v512 = vcombine.low %v497, %v507
          %v513 = vcombine.high %v497, %v507
          %v515 = vunpack.c.l.s4 1983009808
          %v516 = vunpack.c.0.s8 %v515
          %v517 = vlaneseq
          %v518 = vshrl.u32 %v517, 7
          %v519 = vsub.s32 %v516, %v518
          %v520 = vrot.slane %v512, %v519
          %v522 = vunpack.c.l.s4 1983009808
          %v523 = vunpack.c.0.s8 %v522
          %v524 = vlaneseq
          %v525 = vshrl.u32 %v524, 7
          %v526 = vsub.s32 %v523, %v525
          %v527 = vrot.slane %v513, %v526
          %v528 = vcombine.low %v504, %v510
          %v529 = vcombine.high %v504, %v510
          %v531 = vunpack.c.l.s4 1983009808
          %v532 = vunpack.c.0.s8 %v531
          %v533 = vlaneseq
          %v534 = vshrl.u32 %v533, 7
          %v535 = vsub.s32 %v532, %v534
          %v536 = vrot.slane %v528, %v535
          %v538 = vunpack.c.l.s4 1983009808
          %v539 = vunpack.c.0.s8 %v538
          %v540 = vlaneseq
          %v541 = vshrl.u32 %v540, 7
          %v542 = vsub.s32 %v539, %v541
          %v543 = vrot.slane %v529, %v542
          %v544 = vcombine.low %v520, %v536
          %v545 = vcombine.high %v520, %v536
          %v547 = vunpack.c.l.s4 1934713408
          %v548 = vunpack.c.0.s8 %v547
          %v549 = vlaneseq
          %v550 = vshrl.u32 %v549, 7
          %v551 = vsub.s32 %v548, %v550
          %v552 = vrot.slane %v544, %v551
          %v554 = vunpack.c.l.s4 1934713408
          %v555 = vunpack.c.0.s8 %v554
          %v556 = vlaneseq
          %v557 = vshrl.u32 %v556, 7
          %v558 = vsub.s32 %v555, %v557
          %v559 = vrot.slane %v545, %v558
          %v560 = vcombine.low %v527, %v543
          %v561 = vcombine.high %v527, %v543
          %v563 = vunpack.c.l.s4 1934713408
          %v564 = vunpack.c.0.s8 %v563
          %v565 = vlaneseq
          %v566 = vshrl.u32 %v565, 7
          %v567 = vsub.s32 %v564, %v566
          %v568 = vrot.slane %v560, %v567
          %v570 = vunpack.c.l.s4 1934713408
          %v571 = vunpack.c.0.s8 %v570
          %v572 = vlaneseq
          %v573 = vshrl.u32 %v572, 7
          %v574 = vsub.s32 %v571, %v573
          %v575 = vrot.slane %v561, %v574
          %v576 = vcombine.high %v552, 0.0
          %v577 = vcombine.high %v559, 0.0
          %v578 = vcombine.high %v568, 0.0
          %v579 = vcombine.high %v575, 0.0
          %v580 = vcombine.low %v552, %v559
          %v582 = vunpack.c.l.s4 1983009808
          %v583 = vunpack.c.0.s8 %v582
          %v584 = vlaneseq
          %v585 = vshrl.u32 %v584, 7
          %v586 = vsub.s32 %v583, %v585
          %v587 = vrot.slane %v580, %v586
          %v588 = vcombine.low %v576, %v577
          %v590 = vunpack.c.l.s4 1983009808
          %v591 = vunpack.c.0.s8 %v590
          %v592 = vlaneseq
          %v593 = vshrl.u32 %v592, 7
          %v594 = vsub.s32 %v591, %v593
          %v595 = vrot.slane %v588, %v594
          %v596 = vcombine.low %v568, %v575
          %v598 = vunpack.c.l.s4 1983009808
          %v599 = vunpack.c.0.s8 %v598
          %v600 = vlaneseq
          %v601 = vshrl.u32 %v600, 7
          %v602 = vsub.s32 %v599, %v601
          %v603 = vrot.slane %v596, %v602
          %v604 = vcombine.low %v578, %v579
          %v606 = vunpack.c.l.s4 1983009808
          %v607 = vunpack.c.0.s8 %v606
          %v608 = vlaneseq
          %v609 = vshrl.u32 %v608, 7
          %v610 = vsub.s32 %v607, %v609
          %v611 = vrot.slane %v604, %v610
          %v612 = vcombine.low %v587, %v595
          %v613 = vcombine.high %v587, %v595
          %v615 = vunpack.c.l.s4 1934713408
          %v616 = vunpack.c.0.s8 %v615
          %v617 = vlaneseq
          %v618 = vshrl.u32 %v617, 7
          %v619 = vsub.s32 %v616, %v618
          %v620 = vrot.slane %v612, %v619
          %v622 = vunpack.c.l.s4 1934713408
          %v623 = vunpack.c.0.s8 %v622
          %v624 = vlaneseq
          %v625 = vshrl.u32 %v624, 7
          %v626 = vsub.s32 %v623, %v625
          %v627 = vrot.slane %v613, %v626
          %v628 = vcombine.low %v603, %v611
          %v629 = vcombine.high %v603, %v611
          %v631 = vunpack.c.l.s4 1934713408
          %v632 = vunpack.c.0.s8 %v631
          %v633 = vlaneseq
          %v634 = vshrl.u32 %v633, 7
          %v635 = vsub.s32 %v632, %v634
          %v636 = vrot.slane %v628, %v635
          %v638 = vunpack.c.l.s4 1934713408
          %v639 = vunpack.c.0.s8 %v638
          %v640 = vlaneseq
          %v641 = vshrl.u32 %v640, 7
          %v642 = vsub.s32 %v639, %v641
          %v643 = vrot.slane %v629, %v642
          %v644 = vcombine.low %v620, %v636
          %v645 = vcombine.high %v620, %v636
          %v646 = vcombine.low %v627, %v643
          %v647 = vcombine.high %v627, %v643
          %v648 = vpack.c.bf16 %v644, %v644
          %v649 = vpack.c.bf16 %v645, %v645
          %v650 = vpack.c.bf16 %v646, %v646
          %v651 = vpack.c.bf16 %v647, %v647
          %vm652 = vcmask 60416
          %653 = vst.msk [vmem:[#allocation2] sm:$0xf] %vm652, %v648
          %654 = vst.msk [vmem:[#allocation2 + $0x4] sm:$0xf] %vm652, %v649
          %655 = vst.msk [vmem:[#allocation2 + $0x8] sm:$0xf] %vm652, %v650
          %656 = vst.msk [vmem:[#allocation2 + $0xc] sm:$0xf] %vm652, %v651
          %657 = vrot.lane.b32.xlu0 %v497, 96
          %v658 = vpop.permute.xlu0 %657
          %659 = vrot.lane.b32.xlu0 %v504, 96
          %v660 = vpop.permute.xlu0 %659
          %661 = vrot.lane.b32.xlu0 %v507, 96
          %v662 = vpop.permute.xlu0 %661
          %663 = vrot.lane.b32.xlu0 %v510, 96
          %v664 = vpop.permute.xlu0 %663
          %v669 = vcombine.low %v658, %v662
          %v670 = vcombine.high %v658, %v662
          %v672 = vunpack.c.l.s4 1983009808
          %v673 = vunpack.c.0.s8 %v672
          %v674 = vlaneseq
          %v675 = vshrl.u32 %v674, 7
          %v676 = vsub.s32 %v673, %v675
          %v677 = vrot.slane %v669, %v676
          %v679 = vunpack.c.l.s4 1983009808
          %v680 = vunpack.c.0.s8 %v679
          %v681 = vlaneseq
          %v682 = vshrl.u32 %v681, 7
          %v683 = vsub.s32 %v680, %v682
          %v684 = vrot.slane %v670, %v683
          %v685 = vcombine.low %v660, %v664
          %v686 = vcombine.high %v660, %v664
          %v688 = vunpack.c.l.s4 1983009808
          %v689 = vunpack.c.0.s8 %v688
          %v690 = vlaneseq
          %v691 = vshrl.u32 %v690, 7
          %v692 = vsub.s32 %v689, %v691
          %v693 = vrot.slane %v685, %v692
          %v695 = vunpack.c.l.s4 1983009808
          %v696 = vunpack.c.0.s8 %v695
          %v697 = vlaneseq
          %v698 = vshrl.u32 %v697, 7
          %v699 = vsub.s32 %v696, %v698
          %v700 = vrot.slane %v686, %v699
          %v701 = vcombine.low %v677, %v693
          %v702 = vcombine.high %v677, %v693
          %v704 = vunpack.c.l.s4 1934713408
          %v705 = vunpack.c.0.s8 %v704
          %v706 = vlaneseq
          %v707 = vshrl.u32 %v706, 7
          %v708 = vsub.s32 %v705, %v707
          %v709 = vrot.slane %v701, %v708
          %v711 = vunpack.c.l.s4 1934713408
          %v712 = vunpack.c.0.s8 %v711
          %v713 = vlaneseq
          %v714 = vshrl.u32 %v713, 7
          %v715 = vsub.s32 %v712, %v714
          %v716 = vrot.slane %v702, %v715
          %v717 = vcombine.low %v684, %v700
          %v718 = vcombine.high %v684, %v700
          %v720 = vunpack.c.l.s4 1934713408
          %v721 = vunpack.c.0.s8 %v720
          %v722 = vlaneseq
          %v723 = vshrl.u32 %v722, 7
          %v724 = vsub.s32 %v721, %v723
          %v725 = vrot.slane %v717, %v724
          %v727 = vunpack.c.l.s4 1934713408
          %v728 = vunpack.c.0.s8 %v727
          %v729 = vlaneseq
          %v730 = vshrl.u32 %v729, 7
          %v731 = vsub.s32 %v728, %v730
          %v732 = vrot.slane %v718, %v731
          %v733 = vcombine.high %v709, 0.0
          %v734 = vcombine.high %v716, 0.0
          %v735 = vcombine.high %v725, 0.0
          %v736 = vcombine.high %v732, 0.0
          %v737 = vcombine.low %v709, %v716
          %v739 = vunpack.c.l.s4 1983009808
          %v740 = vunpack.c.0.s8 %v739
          %v741 = vlaneseq
          %v742 = vshrl.u32 %v741, 7
          %v743 = vsub.s32 %v740, %v742
          %v744 = vrot.slane %v737, %v743
          %v745 = vcombine.low %v733, %v734
          %v747 = vunpack.c.l.s4 1983009808
          %v748 = vunpack.c.0.s8 %v747
          %v749 = vlaneseq
          %v750 = vshrl.u32 %v749, 7
          %v751 = vsub.s32 %v748, %v750
          %v752 = vrot.slane %v745, %v751
          %v753 = vcombine.low %v725, %v732
          %v755 = vunpack.c.l.s4 1983009808
          %v756 = vunpack.c.0.s8 %v755
          %v757 = vlaneseq
          %v758 = vshrl.u32 %v757, 7
          %v759 = vsub.s32 %v756, %v758
          %v760 = vrot.slane %v753, %v759
          %v761 = vcombine.low %v735, %v736
          %v763 = vunpack.c.l.s4 1983009808
          %v764 = vunpack.c.0.s8 %v763
          %v765 = vlaneseq
          %v766 = vshrl.u32 %v765, 7
          %v767 = vsub.s32 %v764, %v766
          %v768 = vrot.slane %v761, %v767
          %v769 = vcombine.low %v744, %v752
          %v770 = vcombine.high %v744, %v752
          %v772 = vunpack.c.l.s4 1934713408
          %v773 = vunpack.c.0.s8 %v772
          %v774 = vlaneseq
          %v775 = vshrl.u32 %v774, 7
          %v776 = vsub.s32 %v773, %v775
          %v777 = vrot.slane %v769, %v776
          %v779 = vunpack.c.l.s4 1934713408
          %v780 = vunpack.c.0.s8 %v779
          %v781 = vlaneseq
          %v782 = vshrl.u32 %v781, 7
          %v783 = vsub.s32 %v780, %v782
          %v784 = vrot.slane %v770, %v783
          %v785 = vcombine.low %v760, %v768
          %v786 = vcombine.high %v760, %v768
          %v788 = vunpack.c.l.s4 1934713408
          %v789 = vunpack.c.0.s8 %v788
          %v790 = vlaneseq
          %v791 = vshrl.u32 %v790, 7
          %v792 = vsub.s32 %v789, %v791
          %v793 = vrot.slane %v785, %v792
          %v795 = vunpack.c.l.s4 1934713408
          %v796 = vunpack.c.0.s8 %v795
          %v797 = vlaneseq
          %v798 = vshrl.u32 %v797, 7
          %v799 = vsub.s32 %v796, %v798
          %v800 = vrot.slane %v786, %v799
          %v801 = vcombine.low %v777, %v793
          %v802 = vcombine.high %v777, %v793
          %v803 = vcombine.low %v784, %v800
          %v804 = vcombine.high %v784, %v800
          %v805 = vpack.c.bf16 %v801, %v801
          %v806 = vpack.c.bf16 %v802, %v802
          %v807 = vpack.c.bf16 %v803, %v803
          %v808 = vpack.c.bf16 %v804, %v804
          %809 = vst.msk [vmem:[#allocation3] sm:$0xf] %vm652, %v805
          %810 = vst.msk [vmem:[#allocation3 + $0x4] sm:$0xf] %vm652, %v806
          %811 = vst.msk [vmem:[#allocation3 + $0x8] sm:$0xf] %vm652, %v807
          %812 = vst.msk [vmem:[#allocation3 + $0xc] sm:$0xf] %vm652, %v808
        $region68: #{tpu_custom_call.1} parent=47 // pred_fallthru
          _
        %v813 = vld [vmem:[%s372] sm:$0xf]
        %v814 = vld [vmem:[#allocation9] sm:$0xf]
        %v815 = vld [vmem:[#allocation9 + $0x4] sm:$0xf]
        %v816 = vld [vmem:[#allocation9 + $0x8] sm:$0xf]
        %v817 = vld [vmem:[#allocation9 + $0xc] sm:$0xf]
        %v818 = vld [vmem:[#allocation10] sm:$0x1]
        %v820 = vlaneseq
        %v821 = vshrl.u32 %v820, 7
        %v822 = vsub.s32 0, %v821
        %v823 = vrot.slane %v818, %v822
        %v829 = vunpack.c.l.b16 %v814
        %v830 = vunpack.c.l.b16 %v815
        %v831 = vunpack.c.l.b16 %v816
        %v832 = vunpack.c.l.b16 %v817
        %v833 = vpack.c.b16 %v830, %v829
        %v834 = vpack.c.b16 %v832, %v831
        %vm837 = vcmask 261120
        %v839 = vsel %vm837, %v813, 0
        %841 = vmatprep.subr.bf16.mxu0 0
        %842 = vmatpush1.bf16.msra.mxu0 %v833
        %843 = vmatprep.subr.bf16.mxu0 0
        %844 = vmatpush1.bf16.msra.mxu0 %v834
        %845 = vmatprep.subr.bf16.mxu0 0
        %846 = vmatpush1.bf16.msra.mxu0 0
        %847 = vmatprep.subr.bf16.mxu0 0
        %848 = vmatpush1.bf16.msra.mxu0 0
        %849 = vmatprep.subr.bf16.mxu0 0
        %850 = vmatpush1.bf16.msra.mxu0 0
        %851 = vmatprep.subr.bf16.mxu0 0
        %852 = vmatpush1.bf16.msra.mxu0 0
        %853 = vmatprep.subr.bf16.mxu0 0
        %854 = vmatpush1.bf16.msra.mxu0 0
        %855 = vmatprep.subr.bf16.mxu0 0
        %856 = vmatpush1.bf16.msra.mxu0 0
        %857 = vmatprep.subr.bf16.mxu0 0
        %858 = vmatpush1.bf16.msra.mxu0 0
        %859 = vmatprep.subr.bf16.mxu0 0
        %860 = vmatpush1.bf16.msra.mxu0 0
        %861 = vmatprep.subr.bf16.mxu0 0
        %862 = vmatpush1.bf16.msra.mxu0 0
        %863 = vmatprep.subr.bf16.mxu0 0
        %864 = vmatpush1.bf16.msra.mxu0 0
        %865 = vmatprep.subr.bf16.mxu0 0
        %866 = vmatpush1.bf16.msra.mxu0 0
        %867 = vmatprep.subr.bf16.mxu0 0
        %868 = vmatpush1.bf16.msra.mxu0 0
        %869 = vmatprep.subr.bf16.mxu0 0
        %870 = vmatpush1.bf16.msra.mxu0 0
        %871 = vmatprep.subr.bf16.mxu0 0
        %872 = vmatpush1.bf16.msra.mxu0 0
        %873 = vmatprep.mubr.bf16.mxu0 0
        %874 = vmatmul.mubr.bf16.gmra.mrb[0].mxu0 %v839
        %v875 = vpop.f32.mrb[0].mxu0
        %v876 = vadd.f32 %v823, %v875
        %v877 = vpop.f32.mrb[0].mxu0
        %v878 = vpop.f32.mrb[0].mxu0
        %v879 = vpop.f32.mrb[0].mxu0
        %880 = vdwg.mxu0
        %882 = vrot.lane.b32.xlu0 %v876, 120
        %v883 = vpop.permute.xlu0 %882
        %885 = vrot.lane.b32.xlu0 %v876, 112
        %v886 = vpop.permute.xlu0 %885
        %888 = vrot.lane.b32.xlu0 %v876, 104
        %v889 = vpop.permute.xlu0 %888
        %v891 = vcombine.low %v876, %v886
        %v892 = vcombine.high %v876, %v886
        %v894 = vunpack.c.l.s4 1983009808
        %v895 = vunpack.c.0.s8 %v894
        %v896 = vlaneseq
        %v897 = vshrl.u32 %v896, 7
        %v898 = vsub.s32 %v895, %v897
        %v899 = vrot.slane %v891, %v898
        %v901 = vunpack.c.l.s4 1983009808
        %v902 = vunpack.c.0.s8 %v901
        %v903 = vlaneseq
        %v904 = vshrl.u32 %v903, 7
        %v905 = vsub.s32 %v902, %v904
        %v906 = vrot.slane %v892, %v905
        %v907 = vcombine.low %v883, %v889
        %v908 = vcombine.high %v883, %v889
        %v910 = vunpack.c.l.s4 1983009808
        %v911 = vunpack.c.0.s8 %v910
        %v912 = vlaneseq
        %v913 = vshrl.u32 %v912, 7
        %v914 = vsub.s32 %v911, %v913
        %v915 = vrot.slane %v907, %v914
        %v917 = vunpack.c.l.s4 1983009808
        %v918 = vunpack.c.0.s8 %v917
        %v919 = vlaneseq
        %v920 = vshrl.u32 %v919, 7
        %v921 = vsub.s32 %v918, %v920
        %v922 = vrot.slane %v908, %v921
        %v923 = vcombine.low %v899, %v915
        %v924 = vcombine.high %v899, %v915
        %v926 = vunpack.c.l.s4 1934713408
        %v927 = vunpack.c.0.s8 %v926
        %v928 = vlaneseq
        %v929 = vshrl.u32 %v928, 7
        %v930 = vsub.s32 %v927, %v929
        %v931 = vrot.slane %v923, %v930
        %v933 = vunpack.c.l.s4 1934713408
        %v934 = vunpack.c.0.s8 %v933
        %v935 = vlaneseq
        %v936 = vshrl.u32 %v935, 7
        %v937 = vsub.s32 %v934, %v936
        %v938 = vrot.slane %v924, %v937
        %v939 = vcombine.low %v906, %v922
        %v940 = vcombine.high %v906, %v922
        %v942 = vunpack.c.l.s4 1934713408
        %v943 = vunpack.c.0.s8 %v942
        %v944 = vlaneseq
        %v945 = vshrl.u32 %v944, 7
        %v946 = vsub.s32 %v943, %v945
        %v947 = vrot.slane %v939, %v946
        %v949 = vunpack.c.l.s4 1934713408
        %v950 = vunpack.c.0.s8 %v949
        %v951 = vlaneseq
        %v952 = vshrl.u32 %v951, 7
        %v953 = vsub.s32 %v950, %v952
        %v954 = vrot.slane %v940, %v953
        %v955 = vcombine.high %v931, 0.0
        %v956 = vcombine.high %v938, 0.0
        %v957 = vcombine.high %v947, 0.0
        %v958 = vcombine.high %v954, 0.0
        %v959 = vcombine.low %v931, %v938
        %v961 = vunpack.c.l.s4 1983009808
        %v962 = vunpack.c.0.s8 %v961
        %v963 = vlaneseq
        %v964 = vshrl.u32 %v963, 7
        %v965 = vsub.s32 %v962, %v964
        %v966 = vrot.slane %v959, %v965
        %v967 = vcombine.low %v955, %v956
        %v969 = vunpack.c.l.s4 1983009808
        %v970 = vunpack.c.0.s8 %v969
        %v971 = vlaneseq
        %v972 = vshrl.u32 %v971, 7
        %v973 = vsub.s32 %v970, %v972
        %v974 = vrot.slane %v967, %v973
        %v975 = vcombine.low %v947, %v954
        %v977 = vunpack.c.l.s4 1983009808
        %v978 = vunpack.c.0.s8 %v977
        %v979 = vlaneseq
        %v980 = vshrl.u32 %v979, 7
        %v981 = vsub.s32 %v978, %v980
        %v982 = vrot.slane %v975, %v981
        %v983 = vcombine.low %v957, %v958
        %v985 = vunpack.c.l.s4 1983009808
        %v986 = vunpack.c.0.s8 %v985
        %v987 = vlaneseq
        %v988 = vshrl.u32 %v987, 7
        %v989 = vsub.s32 %v986, %v988
        %v990 = vrot.slane %v983, %v989
        %v991 = vcombine.low %v966, %v974
        %v992 = vcombine.high %v966, %v974
        %v994 = vunpack.c.l.s4 1934713408
        %v995 = vunpack.c.0.s8 %v994
        %v996 = vlaneseq
        %v997 = vshrl.u32 %v996, 7
        %v998 = vsub.s32 %v995, %v997
        %v999 = vrot.slane %v991, %v998
        %v1001 = vunpack.c.l.s4 1934713408
        %v1002 = vunpack.c.0.s8 %v1001
        %v1003 = vlaneseq
        %v1004 = vshrl.u32 %v1003, 7
        %v1005 = vsub.s32 %v1002, %v1004
        %v1006 = vrot.slane %v992, %v1005
        %v1007 = vcombine.low %v982, %v990
        %v1008 = vcombine.high %v982, %v990
        %v1010 = vunpack.c.l.s4 1934713408
        %v1011 = vunpack.c.0.s8 %v1010
        %v1012 = vlaneseq
        %v1013 = vshrl.u32 %v1012, 7
        %v1014 = vsub.s32 %v1011, %v1013
        %v1015 = vrot.slane %v1007, %v1014
        %v1017 = vunpack.c.l.s4 1934713408
        %v1018 = vunpack.c.0.s8 %v1017
        %v1019 = vlaneseq
        %v1020 = vshrl.u32 %v1019, 7
        %v1021 = vsub.s32 %v1018, %v1020
        %v1022 = vrot.slane %v1008, %v1021
        %v1023 = vcombine.low %v999, %v1015
        %v1024 = vcombine.high %v999, %v1015
        %v1025 = vcombine.low %v1006, %v1022
        %v1026 = vcombine.high %v1006, %v1022
        %v1027 = vpack.c.bf16 %v1023, %v1023
        %v1028 = vpack.c.bf16 %v1024, %v1024
        %v1029 = vpack.c.bf16 %v1025, %v1025
        %v1030 = vpack.c.bf16 %v1026, %v1026
        %v1031 = vld [vmem:[#allocation2] sm:$0xf]
        %v1032 = vld [vmem:[#allocation2 + $0x4] sm:$0xf]
        %v1033 = vld [vmem:[#allocation2 + $0x8] sm:$0xf]
        %v1034 = vld [vmem:[#allocation2 + $0xc] sm:$0xf]
        %v1035 = vld [vmem:[%s428] sm:$0x1]
        %v1037 = vlaneseq
        %v1038 = vshrl.u32 %v1037, 7
        %v1039 = vsub.s32 0, %v1038
        %v1040 = vrot.slane %v1035, %v1039
        %vm1042 = vcmask 64512
        %v1044 = vsel %vm1042, %v1027, 0
        %v1047 = vsel %vm1042, %v1031, 0
        %1049 = vmatprep.subr.bf16.mxu0 0
        %1050 = vmatpush1.bf16.xpose.msra.mxu0 %v1047
        %1051 = vmatprep.subr.bf16.mxu0 0
        %1052 = vmatpush1.bf16.xpose.msra.mxu0 0
        %1053 = vmatprep.subr.bf16.mxu0 0
        %1054 = vmatpush1.bf16.xpose.msra.mxu0 0
        %1055 = vmatprep.subr.bf16.mxu0 0
        %1056 = vmatpush1.bf16.xpose.msra.mxu0 0
        %1057 = vmatprep.subr.bf16.mxu0 0
        %1058 = vmatpush1.bf16.xpose.msra.mxu0 0
        %1059 = vmatprep.subr.bf16.mxu0 0
        %1060 = vmatpush1.bf16.xpose.msra.mxu0 0
        %1061 = vmatprep.subr.bf16.mxu0 0
        %1062 = vmatpush1.bf16.xpose.msra.mxu0 0
        %1063 = vmatprep.subr.bf16.mxu0 0
        %1064 = vmatpush1.bf16.xpose.msra.mxu0 0
        %1065 = vmatprep.subr.bf16.mxu0 0
        %1066 = vmatpush1.bf16.xpose.msra.mxu0 0
        %1067 = vmatprep.subr.bf16.mxu0 0
        %1068 = vmatpush1.bf16.xpose.msra.mxu0 0
        %1069 = vmatprep.subr.bf16.mxu0 0
        %1070 = vmatpush1.bf16.xpose.msra.mxu0 0
        %1071 = vmatprep.subr.bf16.mxu0 0
        %1072 = vmatpush1.bf16.xpose.msra.mxu0 0
        %1073 = vmatprep.subr.bf16.mxu0 0
        %1074 = vmatpush1.bf16.xpose.msra.mxu0 0
        %1075 = vmatprep.subr.bf16.mxu0 0
        %1076 = vmatpush1.bf16.xpose.msra.mxu0 0
        %1077 = vmatprep.subr.bf16.mxu0 0
        %1078 = vmatpush1.bf16.xpose.msra.mxu0 0
        %1079 = vmatprep.subr.bf16.mxu0 0
        %1080 = vmatpush1.bf16.xpose.msra.mxu0 0
        %1081 = vmatprep.mubr.bf16.mxu0 0
        %1082 = vmatmul.mubr.bf16.gmra.mrb[0].mxu0 %v1044
        %v1083 = vpop.f32.mrb[0].mxu0
        %v1084 = vadd.f32 %v1040, %v1083
        %v1085 = vpop.f32.mrb[0].mxu0
        %v1086 = vpop.f32.mrb[0].mxu0
        %v1087 = vpop.f32.mrb[0].mxu0
        %1088 = vdwg.mxu0
        %v1090 = vsel %vm1042, %v1028, 0
        %v1093 = vsel %vm1042, %v1032, 0
        %1095 = vmatprep.subr.bf16.mxu0 0
        %1096 = vmatpush1.bf16.xpose.msra.mxu0 %v1093
        %1097 = vmatprep.subr.bf16.mxu0 0
        %1098 = vmatpush1.bf16.xpose.msra.mxu0 0
        %1099 = vmatprep.subr.bf16.mxu0 0
        %1100 = vmatpush1.bf16.xpose.msra.mxu0 0
        %1101 = vmatprep.subr.bf16.mxu0 0
        %1102 = vmatpush1.bf16.xpose.msra.mxu0 0
        %1103 = vmatprep.subr.bf16.mxu0 0
        %1104 = vmatpush1.bf16.xpose.msra.mxu0 0
        %1105 = vmatprep.subr.bf16.mxu0 0
        %1106 = vmatpush1.bf16.xpose.msra.mxu0 0
        %1107 = vmatprep.subr.bf16.mxu0 0
        %1108 = vmatpush1.bf16.xpose.msra.mxu0 0
        %1109 = vmatprep.subr.bf16.mxu0 0
        %1110 = vmatpush1.bf16.xpose.msra.mxu0 0
        %1111 = vmatprep.subr.bf16.mxu0 0
        %1112 = vmatpush1.bf16.xpose.msra.mxu0 0
        %1113 = vmatprep.subr.bf16.mxu0 0
        %1114 = vmatpush1.bf16.xpose.msra.mxu0 0
        %1115 = vmatprep.subr.bf16.mxu0 0
        %1116 = vmatpush1.bf16.xpose.msra.mxu0 0
        %1117 = vmatprep.subr.bf16.mxu0 0
        %1118 = vmatpush1.bf16.xpose.msra.mxu0 0
        %1119 = vmatprep.subr.bf16.mxu0 0
        %1120 = vmatpush1.bf16.xpose.msra.mxu0 0
        %1121 = vmatprep.subr.bf16.mxu0 0
        %1122 = vmatpush1.bf16.xpose.msra.mxu0 0
        %1123 = vmatprep.subr.bf16.mxu0 0
        %1124 = vmatpush1.bf16.xpose.msra.mxu0 0
        %1125 = vmatprep.subr.bf16.mxu0 0
        %1126 = vmatpush1.bf16.xpose.msra.mxu0 0
        %1127 = vmatprep.mubr.bf16.mxu0 0
        %1128 = vmatmul.mubr.bf16.gmra.mrb[0].mxu0 %v1090
        %v1129 = vpop.f32.mrb[0].mxu0
        %v1130 = vadd.f32 %v1040, %v1129
        %v1131 = vpop.f32.mrb[0].mxu0
        %v1132 = vpop.f32.mrb[0].mxu0
        %v1133 = vpop.f32.mrb[0].mxu0
        %1134 = vdwg.mxu0
        %v1136 = vsel %vm1042, %v1029, 0
        %v1139 = vsel %vm1042, %v1033, 0
        %1141 = vmatprep.subr.bf16.mxu0 0
        %1142 = vmatpush1.bf16.xpose.msra.mxu0 %v1139
        %1143 = vmatprep.subr.bf16.mxu0 0
        %1144 = vmatpush1.bf16.xpose.msra.mxu0 0
        %1145 = vmatprep.subr.bf16.mxu0 0
        %1146 = vmatpush1.bf16.xpose.msra.mxu0 0
        %1147 = vmatprep.subr.bf16.mxu0 0
        %1148 = vmatpush1.bf16.xpose.msra.mxu0 0
        %1149 = vmatprep.subr.bf16.mxu0 0
        %1150 = vmatpush1.bf16.xpose.msra.mxu0 0
        %1151 = vmatprep.subr.bf16.mxu0 0
        %1152 = vmatpush1.bf16.xpose.msra.mxu0 0
        %1153 = vmatprep.subr.bf16.mxu0 0
        %1154 = vmatpush1.bf16.xpose.msra.mxu0 0
        %1155 = vmatprep.subr.bf16.mxu0 0
        %1156 = vmatpush1.bf16.xpose.msra.mxu0 0
        %1157 = vmatprep.subr.bf16.mxu0 0
        %1158 = vmatpush1.bf16.xpose.msra.mxu0 0
        %1159 = vmatprep.subr.bf16.mxu0 0
        %1160 = vmatpush1.bf16.xpose.msra.mxu0 0
        %1161 = vmatprep.subr.bf16.mxu0 0
        %1162 = vmatpush1.bf16.xpose.msra.mxu0 0
        %1163 = vmatprep.subr.bf16.mxu0 0
        %1164 = vmatpush1.bf16.xpose.msra.mxu0 0
        %1165 = vmatprep.subr.bf16.mxu0 0
        %1166 = vmatpush1.bf16.xpose.msra.mxu0 0
        %1167 = vmatprep.subr.bf16.mxu0 0
        %1168 = vmatpush1.bf16.xpose.msra.mxu0 0
        %1169 = vmatprep.subr.bf16.mxu0 0
        %1170 = vmatpush1.bf16.xpose.msra.mxu0 0
        %1171 = vmatprep.subr.bf16.mxu0 0
        %1172 = vmatpush1.bf16.xpose.msra.mxu0 0
        %1173 = vmatprep.mubr.bf16.mxu0 0
        %1174 = vmatmul.mubr.bf16.gmra.mrb[0].mxu0 %v1136
        %v1175 = vpop.f32.mrb[0].mxu0
        %v1176 = vadd.f32 %v1040, %v1175
        %v1177 = vpop.f32.mrb[0].mxu0
        %v1178 = vpop.f32.mrb[0].mxu0
        %v1179 = vpop.f32.mrb[0].mxu0
        %1180 = vdwg.mxu0
        %v1182 = vsel %vm1042, %v1030, 0
        %v1185 = vsel %vm1042, %v1034, 0
        %1187 = vmatprep.subr.bf16.mxu0 0
        %1188 = vmatpush1.bf16.xpose.msra.mxu0 %v1185
        %1189 = vmatprep.subr.bf16.mxu0 0
        %1190 = vmatpush1.bf16.xpose.msra.mxu0 0
        %1191 = vmatprep.subr.bf16.mxu0 0
        %1192 = vmatpush1.bf16.xpose.msra.mxu0 0
        %1193 = vmatprep.subr.bf16.mxu0 0
        %1194 = vmatpush1.bf16.xpose.msra.mxu0 0
        %1195 = vmatprep.subr.bf16.mxu0 0
        %1196 = vmatpush1.bf16.xpose.msra.mxu0 0
        %1197 = vmatprep.subr.bf16.mxu0 0
        %1198 = vmatpush1.bf16.xpose.msra.mxu0 0
        %1199 = vmatprep.subr.bf16.mxu0 0
        %1200 = vmatpush1.bf16.xpose.msra.mxu0 0
        %1201 = vmatprep.subr.bf16.mxu0 0
        %1202 = vmatpush1.bf16.xpose.msra.mxu0 0
        %1203 = vmatprep.subr.bf16.mxu0 0
        %1204 = vmatpush1.bf16.xpose.msra.mxu0 0
        %1205 = vmatprep.subr.bf16.mxu0 0
        %1206 = vmatpush1.bf16.xpose.msra.mxu0 0
        %1207 = vmatprep.subr.bf16.mxu0 0
        %1208 = vmatpush1.bf16.xpose.msra.mxu0 0
        %1209 = vmatprep.subr.bf16.mxu0 0
        %1210 = vmatpush1.bf16.xpose.msra.mxu0 0
        %1211 = vmatprep.subr.bf16.mxu0 0
        %1212 = vmatpush1.bf16.xpose.msra.mxu0 0
        %1213 = vmatprep.subr.bf16.mxu0 0
        %1214 = vmatpush1.bf16.xpose.msra.mxu0 0
        %1215 = vmatprep.subr.bf16.mxu0 0
        %1216 = vmatpush1.bf16.xpose.msra.mxu0 0
        %1217 = vmatprep.subr.bf16.mxu0 0
        %1218 = vmatpush1.bf16.xpose.msra.mxu0 0
        %1219 = vmatprep.mubr.bf16.mxu0 0
        %1220 = vmatmul.mubr.bf16.gmra.mrb[0].mxu0 %v1182
        %v1221 = vpop.f32.mrb[0].mxu0
        %v1222 = vadd.f32 %v1040, %v1221
        %v1223 = vpop.f32.mrb[0].mxu0
        %v1224 = vpop.f32.mrb[0].mxu0
        %v1225 = vpop.f32.mrb[0].mxu0
        %1226 = vdwg.mxu0
        %v1227 = vsel %vm1042, %v1084, -inf
        %1228 = vmax.xlane.f32.xlu0 %v1227
        %v1229 = vpop.xlane.xlu0 %1228
        %v1230 = vsel %vm1042, %v1130, -inf
        %1231 = vmax.xlane.f32.xlu0 %v1230
        %v1232 = vpop.xlane.xlu0 %1231
        %v1233 = vsel %vm1042, %v1176, -inf
        %1234 = vmax.xlane.f32.xlu0 %v1233
        %v1235 = vpop.xlane.xlu0 %1234
        %v1236 = vsel %vm1042, %v1222, -inf
        %1237 = vmax.xlane.f32.xlu0 %v1236
        %v1238 = vpop.xlane.xlu0 %1237
        %v1239 = vsub.f32 %v1084, %v1229
        %v1240 = vsub.f32 %v1130, %v1232
        %v1241 = vsub.f32 %v1176, %v1235
        %v1242 = vsub.f32 %v1222, %v1238
        %v1243 = vmul.f32 %v1239, 1.442695
        %v1244 = vpow.pop %v1243
        %v1245 = vmul.f32 %v1240, 1.442695
        %v1246 = vpow.pop %v1245
        %v1247 = vmul.f32 %v1241, 1.442695
        %v1248 = vpow.pop %v1247
        %v1249 = vmul.f32 %v1242, 1.442695
        %v1250 = vpow.pop %v1249
        %v1251 = vsel %vm1042, %v1244, 0.0
        %1252 = vadd.xlane.f32.xlu0 %v1251
        %v1253 = vpop.xlane.xlu0 %1252
        %v1254 = vsel %vm1042, %v1246, 0.0
        %1255 = vadd.xlane.f32.xlu0 %v1254
        %v1256 = vpop.xlane.xlu0 %1255
        %v1257 = vsel %vm1042, %v1248, 0.0
        %1258 = vadd.xlane.f32.xlu0 %v1257
        %v1259 = vpop.xlane.xlu0 %1258
        %v1260 = vsel %vm1042, %v1250, 0.0
        %1261 = vadd.xlane.f32.xlu0 %v1260
        %v1262 = vpop.xlane.xlu0 %1261
        %v1263 = vrcp.pop %v1253
        %v1264 = vrcp.pop %v1256
        %v1265 = vrcp.pop %v1259
        %v1266 = vrcp.pop %v1262
        %v1267 = vmul.f32 %v1244, %v1263
        %v1268 = vmul.f32 %v1246, %v1264
        %v1269 = vmul.f32 %v1248, %v1265
        %v1270 = vmul.f32 %v1250, %v1266
        %1271 = vst.msk [vmem:[%s425] sm:$0xff] %vm1042, %v1267
        %1272 = vst.msk [vmem:[%s425 + $0x8] sm:$0xff] %vm1042, %v1268
        %1273 = vst.msk [vmem:[%s425 + $0x10] sm:$0xff] %vm1042, %v1269
        %1274 = vst.msk [vmem:[%s425 + $0x18] sm:$0xff] %vm1042, %v1270
        %v1275 = vpack.c.bf16 %v1267, %v1267
        %v1276 = vpack.c.bf16 %v1268, %v1268
        %v1277 = vpack.c.bf16 %v1269, %v1269
        %v1278 = vpack.c.bf16 %v1270, %v1270
        %v1279 = vld [vmem:[#allocation3] sm:$0xf]
        %v1280 = vld [vmem:[#allocation3 + $0x4] sm:$0xf]
        %v1281 = vld [vmem:[#allocation3 + $0x8] sm:$0xf]
        %v1282 = vld [vmem:[#allocation3 + $0xc] sm:$0xf]
        %v1284 = vsel %vm1042, %v1275, 0
        %vm1286 = vcmask 1043456
        %v1288 = vsel %vm1286, %v1279, 0
        %1290 = vmatprep.subr.bf16.mxu0 0
        %1291 = vmatpush1.bf16.msra.mxu0 %v1288
        %1292 = vmatprep.subr.bf16.mxu0 0
        %1293 = vmatpush1.bf16.msra.mxu0 0
        %1294 = vmatprep.subr.bf16.mxu0 0
        %1295 = vmatpush1.bf16.msra.mxu0 0
        %1296 = vmatprep.subr.bf16.mxu0 0
        %1297 = vmatpush1.bf16.msra.mxu0 0
        %1298 = vmatprep.subr.bf16.mxu0 0
        %1299 = vmatpush1.bf16.msra.mxu0 0
        %1300 = vmatprep.subr.bf16.mxu0 0
        %1301 = vmatpush1.bf16.msra.mxu0 0
        %1302 = vmatprep.subr.bf16.mxu0 0
        %1303 = vmatpush1.bf16.msra.mxu0 0
        %1304 = vmatprep.subr.bf16.mxu0 0
        %1305 = vmatpush1.bf16.msra.mxu0 0
        %1306 = vmatprep.subr.bf16.mxu0 0
        %1307 = vmatpush1.bf16.msra.mxu0 0
        %1308 = vmatprep.subr.bf16.mxu0 0
        %1309 = vmatpush1.bf16.msra.mxu0 0
        %1310 = vmatprep.subr.bf16.mxu0 0
        %1311 = vmatpush1.bf16.msra.mxu0 0
        %1312 = vmatprep.subr.bf16.mxu0 0
        %1313 = vmatpush1.bf16.msra.mxu0 0
        %1314 = vmatprep.subr.bf16.mxu0 0
        %1315 = vmatpush1.bf16.msra.mxu0 0
        %1316 = vmatprep.subr.bf16.mxu0 0
        %1317 = vmatpush1.bf16.msra.mxu0 0
        %1318 = vmatprep.subr.bf16.mxu0 0
        %1319 = vmatpush1.bf16.msra.mxu0 0
        %1320 = vmatprep.subr.bf16.mxu0 0
        %1321 = vmatpush1.bf16.msra.mxu0 0
        %1322 = vmatprep.mubr.bf16.mxu0 0
        %1323 = vmatmul.mubr.bf16.gmra.mrb[0].mxu0 %v1284
        %v1324 = vpop.f32.mrb[0].mxu0
        %v1325 = vadd.f32 0.0, %v1324
        %v1326 = vpop.f32.mrb[0].mxu0
        %v1327 = vpop.f32.mrb[0].mxu0
        %v1328 = vpop.f32.mrb[0].mxu0
        %1329 = vdwg.mxu0
        %v1331 = vsel %vm1042, %v1276, 0
        %v1334 = vsel %vm1286, %v1280, 0
        %1336 = vmatprep.subr.bf16.mxu0 0
        %1337 = vmatpush1.bf16.msra.mxu0 %v1334
        %1338 = vmatprep.subr.bf16.mxu0 0
        %1339 = vmatpush1.bf16.msra.mxu0 0
        %1340 = vmatprep.subr.bf16.mxu0 0
        %1341 = vmatpush1.bf16.msra.mxu0 0
        %1342 = vmatprep.subr.bf16.mxu0 0
        %1343 = vmatpush1.bf16.msra.mxu0 0
        %1344 = vmatprep.subr.bf16.mxu0 0
        %1345 = vmatpush1.bf16.msra.mxu0 0
        %1346 = vmatprep.subr.bf16.mxu0 0
        %1347 = vmatpush1.bf16.msra.mxu0 0
        %1348 = vmatprep.subr.bf16.mxu0 0
        %1349 = vmatpush1.bf16.msra.mxu0 0
        %1350 = vmatprep.subr.bf16.mxu0 0
        %1351 = vmatpush1.bf16.msra.mxu0 0
        %1352 = vmatprep.subr.bf16.mxu0 0
        %1353 = vmatpush1.bf16.msra.mxu0 0
        %1354 = vmatprep.subr.bf16.mxu0 0
        %1355 = vmatpush1.bf16.msra.mxu0 0
        %1356 = vmatprep.subr.bf16.mxu0 0
        %1357 = vmatpush1.bf16.msra.mxu0 0
        %1358 = vmatprep.subr.bf16.mxu0 0
        %1359 = vmatpush1.bf16.msra.mxu0 0
        %1360 = vmatprep.subr.bf16.mxu0 0
        %1361 = vmatpush1.bf16.msra.mxu0 0
        %1362 = vmatprep.subr.bf16.mxu0 0
        %1363 = vmatpush1.bf16.msra.mxu0 0
        %1364 = vmatprep.subr.bf16.mxu0 0
        %1365 = vmatpush1.bf16.msra.mxu0 0
        %1366 = vmatprep.subr.bf16.mxu0 0
        %1367 = vmatpush1.bf16.msra.mxu0 0
        %1368 = vmatprep.mubr.bf16.mxu0 0
        %1369 = vmatmul.mubr.bf16.gmra.mrb[0].mxu0 %v1331
        %v1370 = vpop.f32.mrb[0].mxu0
        %v1371 = vadd.f32 0.0, %v1370
        %v1372 = vpop.f32.mrb[0].mxu0
        %v1373 = vpop.f32.mrb[0].mxu0
        %v1374 = vpop.f32.mrb[0].mxu0
        %1375 = vdwg.mxu0
        %v1377 = vsel %vm1042, %v1277, 0
        %v1380 = vsel %vm1286, %v1281, 0
        %1382 = vmatprep.subr.bf16.mxu0 0
        %1383 = vmatpush1.bf16.msra.mxu0 %v1380
        %1384 = vmatprep.subr.bf16.mxu0 0
        %1385 = vmatpush1.bf16.msra.mxu0 0
        %1386 = vmatprep.subr.bf16.mxu0 0
        %1387 = vmatpush1.bf16.msra.mxu0 0
        %1388 = vmatprep.subr.bf16.mxu0 0
        %1389 = vmatpush1.bf16.msra.mxu0 0
        %1390 = vmatprep.subr.bf16.mxu0 0
        %1391 = vmatpush1.bf16.msra.mxu0 0
        %1392 = vmatprep.subr.bf16.mxu0 0
        %1393 = vmatpush1.bf16.msra.mxu0 0
        %1394 = vmatprep.subr.bf16.mxu0 0
        %1395 = vmatpush1.bf16.msra.mxu0 0
        %1396 = vmatprep.subr.bf16.mxu0 0
        %1397 = vmatpush1.bf16.msra.mxu0 0
        %1398 = vmatprep.subr.bf16.mxu0 0
        %1399 = vmatpush1.bf16.msra.mxu0 0
        %1400 = vmatprep.subr.bf16.mxu0 0
        %1401 = vmatpush1.bf16.msra.mxu0 0
        %1402 = vmatprep.subr.bf16.mxu0 0
        %1403 = vmatpush1.bf16.msra.mxu0 0
        %1404 = vmatprep.subr.bf16.mxu0 0
        %1405 = vmatpush1.bf16.msra.mxu0 0
        %1406 = vmatprep.subr.bf16.mxu0 0
        %1407 = vmatpush1.bf16.msra.mxu0 0
        %1408 = vmatprep.subr.bf16.mxu0 0
        %1409 = vmatpush1.bf16.msra.mxu0 0
        %1410 = vmatprep.subr.bf16.mxu0 0
        %1411 = vmatpush1.bf16.msra.mxu0 0
        %1412 = vmatprep.subr.bf16.mxu0 0
        %1413 = vmatpush1.bf16.msra.mxu0 0
        %1414 = vmatprep.mubr.bf16.mxu0 0
        %1415 = vmatmul.mubr.bf16.gmra.mrb[0].mxu0 %v1377
        %v1416 = vpop.f32.mrb[0].mxu0
        %v1417 = vadd.f32 0.0, %v1416
        %v1418 = vpop.f32.mrb[0].mxu0
        %v1419 = vpop.f32.mrb[0].mxu0
        %v1420 = vpop.f32.mrb[0].mxu0
        %1421 = vdwg.mxu0
        %v1423 = vsel %vm1042, %v1278, 0
        %v1426 = vsel %vm1286, %v1282, 0
        %1428 = vmatprep.subr.bf16.mxu0 0
        %1429 = vmatpush1.bf16.msra.mxu0 %v1426
        %1430 = vmatprep.subr.bf16.mxu0 0
        %1431 = vmatpush1.bf16.msra.mxu0 0
        %1432 = vmatprep.subr.bf16.mxu0 0
        %1433 = vmatpush1.bf16.msra.mxu0 0
        %1434 = vmatprep.subr.bf16.mxu0 0
        %1435 = vmatpush1.bf16.msra.mxu0 0
        %1436 = vmatprep.subr.bf16.mxu0 0
        %1437 = vmatpush1.bf16.msra.mxu0 0
        %1438 = vmatprep.subr.bf16.mxu0 0
        %1439 = vmatpush1.bf16.msra.mxu0 0
        %1440 = vmatprep.subr.bf16.mxu0 0
        %1441 = vmatpush1.bf16.msra.mxu0 0
        %1442 = vmatprep.subr.bf16.mxu0 0
        %1443 = vmatpush1.bf16.msra.mxu0 0
        %1444 = vmatprep.subr.bf16.mxu0 0
        %1445 = vmatpush1.bf16.msra.mxu0 0
        %1446 = vmatprep.subr.bf16.mxu0 0
        %1447 = vmatpush1.bf16.msra.mxu0 0
        %1448 = vmatprep.subr.bf16.mxu0 0
        %1449 = vmatpush1.bf16.msra.mxu0 0
        %1450 = vmatprep.subr.bf16.mxu0 0
        %1451 = vmatpush1.bf16.msra.mxu0 0
        %1452 = vmatprep.subr.bf16.mxu0 0
        %1453 = vmatpush1.bf16.msra.mxu0 0
        %1454 = vmatprep.subr.bf16.mxu0 0
        %1455 = vmatpush1.bf16.msra.mxu0 0
        %1456 = vmatprep.subr.bf16.mxu0 0
        %1457 = vmatpush1.bf16.msra.mxu0 0
        %1458 = vmatprep.subr.bf16.mxu0 0
        %1459 = vmatpush1.bf16.msra.mxu0 0
        %1460 = vmatprep.mubr.bf16.mxu0 0
        %1461 = vmatmul.mubr.bf16.gmra.mrb[0].mxu0 %v1423
        %v1462 = vpop.f32.mrb[0].mxu0
        %v1463 = vadd.f32 0.0, %v1462
        %v1464 = vpop.f32.mrb[0].mxu0
        %v1465 = vpop.f32.mrb[0].mxu0
        %v1466 = vpop.f32.mrb[0].mxu0
        %1467 = vdwg.mxu0
        %v1468 = vcombine.low %v1325, %v1417
        %v1469 = vcombine.high %v1325, %v1417
        %v1471 = vunpack.c.l.s4 1983009808
        %v1472 = vunpack.c.0.s8 %v1471
        %v1473 = vlaneseq
        %v1474 = vshrl.u32 %v1473, 7
        %v1475 = vsub.s32 %v1472, %v1474
        %v1476 = vrot.slane %v1468, %v1475
        %v1478 = vunpack.c.l.s4 1983009808
        %v1479 = vunpack.c.0.s8 %v1478
        %v1480 = vlaneseq
        %v1481 = vshrl.u32 %v1480, 7
        %v1482 = vsub.s32 %v1479, %v1481
        %v1483 = vrot.slane %v1469, %v1482
        %v1484 = vcombine.low %v1371, %v1463
        %v1485 = vcombine.high %v1371, %v1463
        %v1487 = vunpack.c.l.s4 1983009808
        %v1488 = vunpack.c.0.s8 %v1487
        %v1489 = vlaneseq
        %v1490 = vshrl.u32 %v1489, 7
        %v1491 = vsub.s32 %v1488, %v1490
        %v1492 = vrot.slane %v1484, %v1491
        %v1494 = vunpack.c.l.s4 1983009808
        %v1495 = vunpack.c.0.s8 %v1494
        %v1496 = vlaneseq
        %v1497 = vshrl.u32 %v1496, 7
        %v1498 = vsub.s32 %v1495, %v1497
        %v1499 = vrot.slane %v1485, %v1498
        %v1500 = vcombine.low %v1476, %v1492
        %v1501 = vcombine.high %v1476, %v1492
        %v1503 = vunpack.c.l.s4 1934713408
        %v1504 = vunpack.c.0.s8 %v1503
        %v1505 = vlaneseq
        %v1506 = vshrl.u32 %v1505, 7
        %v1507 = vsub.s32 %v1504, %v1506
        %v1508 = vrot.slane %v1500, %v1507
        %v1510 = vunpack.c.l.s4 1934713408
        %v1511 = vunpack.c.0.s8 %v1510
        %v1512 = vlaneseq
        %v1513 = vshrl.u32 %v1512, 7
        %v1514 = vsub.s32 %v1511, %v1513
        %v1515 = vrot.slane %v1501, %v1514
        %v1516 = vcombine.low %v1483, %v1499
        %v1517 = vcombine.high %v1483, %v1499
        %v1519 = vunpack.c.l.s4 1934713408
        %v1520 = vunpack.c.0.s8 %v1519
        %v1521 = vlaneseq
        %v1522 = vshrl.u32 %v1521, 7
        %v1523 = vsub.s32 %v1520, %v1522
        %v1524 = vrot.slane %v1516, %v1523
        %v1526 = vunpack.c.l.s4 1934713408
        %v1527 = vunpack.c.0.s8 %v1526
        %v1528 = vlaneseq
        %v1529 = vshrl.u32 %v1528, 7
        %v1530 = vsub.s32 %v1527, %v1529
        %v1531 = vrot.slane %v1517, %v1530
        %v1532 = vcombine.high %v1508, 0.0
        %v1533 = vcombine.high %v1515, 0.0
        %v1534 = vcombine.high %v1524, 0.0
        %v1535 = vcombine.high %v1531, 0.0
        %v1536 = vcombine.low %v1508, %v1515
        %v1538 = vunpack.c.l.s4 1983009808
        %v1539 = vunpack.c.0.s8 %v1538
        %v1540 = vlaneseq
        %v1541 = vshrl.u32 %v1540, 7
        %v1542 = vsub.s32 %v1539, %v1541
        %v1543 = vrot.slane %v1536, %v1542
        %v1544 = vcombine.low %v1532, %v1533
        %v1546 = vunpack.c.l.s4 1983009808
        %v1547 = vunpack.c.0.s8 %v1546
        %v1548 = vlaneseq
        %v1549 = vshrl.u32 %v1548, 7
        %v1550 = vsub.s32 %v1547, %v1549
        %v1551 = vrot.slane %v1544, %v1550
        %v1552 = vcombine.low %v1524, %v1531
        %v1554 = vunpack.c.l.s4 1983009808
        %v1555 = vunpack.c.0.s8 %v1554
        %v1556 = vlaneseq
        %v1557 = vshrl.u32 %v1556, 7
        %v1558 = vsub.s32 %v1555, %v1557
        %v1559 = vrot.slane %v1552, %v1558
        %v1560 = vcombine.low %v1534, %v1535
        %v1562 = vunpack.c.l.s4 1983009808
        %v1563 = vunpack.c.0.s8 %v1562
        %v1564 = vlaneseq
        %v1565 = vshrl.u32 %v1564, 7
        %v1566 = vsub.s32 %v1563, %v1565
        %v1567 = vrot.slane %v1560, %v1566
        %v1568 = vcombine.low %v1543, %v1551
        %v1569 = vcombine.high %v1543, %v1551
        %v1571 = vunpack.c.l.s4 1934713408
        %v1572 = vunpack.c.0.s8 %v1571
        %v1573 = vlaneseq
        %v1574 = vshrl.u32 %v1573, 7
        %v1575 = vsub.s32 %v1572, %v1574
        %v1576 = vrot.slane %v1568, %v1575
        %v1578 = vunpack.c.l.s4 1934713408
        %v1579 = vunpack.c.0.s8 %v1578
        %v1580 = vlaneseq
        %v1581 = vshrl.u32 %v1580, 7
        %v1582 = vsub.s32 %v1579, %v1581
        %v1583 = vrot.slane %v1569, %v1582
        %v1584 = vcombine.low %v1559, %v1567
        %v1585 = vcombine.high %v1559, %v1567
        %v1587 = vunpack.c.l.s4 1934713408
        %v1588 = vunpack.c.0.s8 %v1587
        %v1589 = vlaneseq
        %v1590 = vshrl.u32 %v1589, 7
        %v1591 = vsub.s32 %v1588, %v1590
        %v1592 = vrot.slane %v1584, %v1591
        %v1594 = vunpack.c.l.s4 1934713408
        %v1595 = vunpack.c.0.s8 %v1594
        %v1596 = vlaneseq
        %v1597 = vshrl.u32 %v1596, 7
        %v1598 = vsub.s32 %v1595, %v1597
        %v1599 = vrot.slane %v1585, %v1598
        %v1600 = vcombine.low %v1576, %v1592
        %v1601 = vcombine.high %v1576, %v1592
        %v1602 = vcombine.low %v1583, %v1599
        %v1603 = vcombine.high %v1583, %v1599
        %1605 = vrot.lane.b32.xlu0 %v1601, 8
        %v1606 = vpop.permute.xlu0 %1605
        %1609 = vrot.lane.b32.xlu0 %v1602, 16
        %v1610 = vpop.permute.xlu0 %1609
        %1613 = vrot.lane.b32.xlu0 %v1603, 24
        %v1614 = vpop.permute.xlu0 %1613
        %v1616 = vsel %vm1042, %v1600, %v1606
        %vm1617 = vcmask 130048
        %v1618 = vsel %vm1617, %v1616, %v1610
        %vm1619 = vcmask 195584
        %v1620 = vsel %vm1619, %v1618, %v1614
        %1621 = vst.msk [vmem:[%s418] sm:$0xff] %vm837, %v1620
        %s1622 = sand.u32 %s219, 1
        %s1623 = scalar_lea.sflag [#allocation6], %s1622
        %s1624 = sand.u32 %s219, 1
        %s1625 = smul.addr %s1624, 8
        %s1626 = scalar_lea.vmem [#allocation12], %s1625
        %s1627 = sand.u32 %s247, 1
        %s1628 = scalar_lea.sflag [#allocation14], %s1627
        %s1629 = sand.u32 %s247, 1
        %s1630 = smul.addr %s1629, 32
        %s1631 = scalar_lea.vmem [#allocation13], %s1630
        // Predicated region
        $region69: #{tpu_custom_call.1} parent=47 // pred_check
          %p1632 = pneg %p229
        $region70: #{tpu_custom_call.1} parent=47 // pred_check_branch
          %1634 = sbr.rel (%p1632) target = $region72
        $region71: #{tpu_custom_call.1} parent=47 // pred_region
          %s1636 = ssub.s32 128, 128
          %1637 = vsyncadd %s1623, %s1636
          %s1638 = sadd.s32 %s38, %s37
          %s1639 = smul.addr %s1638, 128
          %s1640 = scalar_lea.hbm %s7, %s1639
          %s1642 = sshll.u32 %s1626, 4
          %s1643 = int_to_ptr.vmem [resolvable:$true] %s1642
          %1645 = dma.vmem_to_hbm [thread:$0]  %s1643, 128, %s1640, %s1623
        $region72: #{tpu_custom_call.1} parent=47 // pred_fallthru
          _
        // Predicated region
        $region73: #{tpu_custom_call.1} parent=47 // pred_check
          %p1646 = pneg %p257
        $region74: #{tpu_custom_call.1} parent=47 // pred_check_branch
          %1648 = sbr.rel (%p1646) target = $region76
        $region75: #{tpu_custom_call.1} parent=47 // pred_region
          %s1650 = ssub.s32 512, 512
          %1651 = vsyncadd %s1628, %s1650
          %s1652 = smul.addr %s37, 4
          %s1653 = sadd.s32 %s38, %s1652
          %s1654 = smul.addr %s1653, 128
          %s1655 = scalar_lea.hbm %s8, %s1654
          %s1656 = sshll.u32 %s1631, 4
          %s1657 = int_to_ptr.vmem [resolvable:$true] %s1656
          %1662 = dma.vmem_to_hbm [thread:$0]  %s1657, 512, %s1655, %s1628, 128, 128, 8
        $region76: #{tpu_custom_call.1} parent=47 // pred_fallthru
          _
      $region48: #{tpu_custom_call.1} parent=5 // pred_fallthru
        _
      %p1663 = scmp.le.s32.totalorder 2, %s28
      // Predicated region
      $region77: #{tpu_custom_call.1} parent=5 // pred_check
        %p1664 = pneg %p1663
      $region78: #{tpu_custom_call.1} parent=5 // pred_check_branch
        %1666 = sbr.rel (%p1664) target = $region80
      $region79: #{tpu_custom_call.1} parent=5 // pred_region
        %s1667 = ssub.s32 %s28, 2
        // Predicated region
        $region81: #{tpu_custom_call.1} parent=79 // pred_check
          %p1668 = pneg %p235
        $region82: #{tpu_custom_call.1} parent=79 // pred_check_branch
          %1670 = sbr.rel (%p1668) target = $region84
        $region83: #{tpu_custom_call.1} parent=79 // pred_region
          %s1671 = sand.u32 %s220, 1
          %s1672 = scalar_lea.sflag [#allocation6], %s1671
          %s1673 = sand.u32 %s220, 1
          %s1674 = smul.addr %s1673, 8
          %s1675 = scalar_lea.vmem [#allocation12], %s1674
          %1676 = dma.done %s1672, 128
        $region84: #{tpu_custom_call.1} parent=79 // pred_fallthru
          _
        // Predicated region
        $region85: #{tpu_custom_call.1} parent=79 // pred_check
          %p1677 = pneg %p263
        $region86: #{tpu_custom_call.1} parent=79 // pred_check_branch
          %1679 = sbr.rel (%p1677) target = $region88
        $region87: #{tpu_custom_call.1} parent=79 // pred_region
          %s1680 = sand.u32 %s248, 1
          %s1681 = scalar_lea.sflag [#allocation14], %s1680
          %s1682 = sand.u32 %s248, 1
          %s1683 = smul.addr %s1682, 32
          %s1684 = scalar_lea.vmem [#allocation13], %s1683
          %1685 = dma.done %s1681, 512
        $region88: #{tpu_custom_call.1} parent=79 // pred_fallthru
          _
      $region80: #{tpu_custom_call.1} parent=5 // pred_fallthru
        _
    $region6: #{tpu_custom_call.1} parent=1 // loop_footer
      %s32 = sadd.s32 1, %s28
    $region7: #{tpu_custom_call.1} parent=1 // loop_footer_branch
      %27 = sbr.rel target = $region3
    $region8: #{tpu_custom_call.1} parent=1 // loop_exit
      _
    %1686 = vsyncpa [#allocation5], 1
    %s1687 = scalar_lea.sflag [#allocation5], 1
    %1688 = vsyncpa %s1687, 1
    %1689 = vsyncpa [#allocation8], 1
    %s1690 = scalar_lea.sflag [#allocation8], 1
    %1691 = vsyncpa %s1690, 1
    %1692 = vsyncpa [#allocation11], 1
    %1693 = vsyncpa [#allocation6], 1
    %s1694 = scalar_lea.sflag [#allocation6], 1
    %1695 = vsyncpa %s1694, 1
    %1696 = vsyncpa [#allocation14], 1
    %s1697 = scalar_lea.sflag [#allocation14], 1
    %1698 = vsyncpa %s1697, 1

</llo_original>
